<compile_context>
chip_gen: v6e
topology: v6e:2x2x1
jax: 0.10.0
libtpu: 0.0.40
codegen_flags: <defaults>
</compile_context>

<pallas_src>
import numpy as np
import jax
import jax.numpy as jnp
from jax.experimental import pallas as pl
from jax.experimental.pallas import tpu as pltpu

HIDDEN = 32
NUM_CLASSES = 2          # label_set = [0, 1]
LANES = 128
MAX_TILE_ROWS = 512      # up to 512*128 = 65536 voxels (~1 MB moved) per grid step
PATCH_SIZE = (8, 8, 4)   # scaled-down analogue of [256, 256, 64]
OVERLAP = 0.5
LABEL_SET = (0, 1)
MAPPED_LABEL_SET = (0, 133)

# gaussian-weight periodicity trick requires the patch volume to be lane-aligned
assert (PATCH_SIZE[0] * PATCH_SIZE[1] * PATCH_SIZE[2]) % LANES == 0


def _round_up(v, m):
    return ((v + m - 1) // m) * m


# ----------------------------- Pallas kernel --------------------------------

def _predictor_kernel(x_ref, gw_ref, w1_ref, be_ref, w2_ref, b2_ref, out_ref):
    """Per-voxel prompt-conditioned MLP + gaussian weighting, pure VPU.

    x_ref  : (TR, 128) f32 voxel intensities (voxels on lanes & sublanes)
    gw_ref : (TR, 128) f32 gaussian importance weights (periodic tile, same block every step)
    w1/be/w2/b2 refs : small 1-D f32 parameter vectors in SMEM
    out_ref: (NUM_CLASSES, TR, 128) gaussian-weighted logits (lane-dense stores)
    """
    x = x_ref[...]
    gw = gw_ref[...]
    # class accumulators initialized with the output bias
    accs = [jnp.zeros_like(x) + b2_ref[c] for c in range(NUM_CLASSES)]
    # Degenerate matmuls (K=C_in=1, then K=32/N=2) stay off the MXU:
    # unrolled scalar-broadcast FMAs on the VPU.
    for j in range(HIDDEN):
        h = jnp.maximum(x * w1_ref[j] + be_ref[j], 0.0)       # ReLU(w1_j*x + (b1+ctx)_j)
        for c in range(NUM_CLASSES):
            accs[c] = accs[c] + h * w2_ref[j * NUM_CLASSES + c]
    for c in range(NUM_CLASSES):
        out_ref[c] = accs[c] * gw                             # gaussian importance weighting


def run_predictor(x_flat, gmap_flat, w1_vec, bias_eff_vec, w2_flat, b2_vec):
    """x_flat: [N] f32 voxel values (patch-major), gmap_flat: [V] gaussian weights.

    Returns gaussian-weighted logits [NUM_CLASSES, N] f32.
    """
    n = int(x_flat.shape[0])
    v = int(gmap_flat.shape[0])
    rows_per_patch = v // LANES                              # gaussian-weight period in rows

    n_rows = -(-n // LANES)
    # Tile sizing: large tiles (amortize per-step overhead / approach HBM roofline)
    # but keep >= 2 grid steps when possible so v7x's two TensorCores both get work.
    align = int(np.lcm(8, rows_per_patch))
    tile_rows = min(_round_up(MAX_TILE_ROWS, align),
                    max(align, _round_up(-(-n_rows // 2), align)))
    rows_pad = _round_up(n_rows, tile_rows)
    n_pad = rows_pad * LANES

    x2d = jnp.pad(x_flat, (0, n_pad - n)).reshape(rows_pad, LANES)
    # One periodic gaussian-weight tile reused by every grid step (no [N,1] HBM array).
    gw_tile = jnp.tile(gmap_flat.reshape(rows_per_patch, LANES),
                       (tile_rows // rows_per_patch, 1))

    smem_spec = pl.BlockSpec(memory_space=pltpu.MemorySpace.SMEM)
    out = pl.pallas_call(
        _predictor_kernel,
        out_shape=jax.ShapeDtypeStruct((NUM_CLASSES, rows_pad, LANES), jnp.float32),
        grid_spec=pltpu.PrefetchScalarGridSpec(
            num_scalar_prefetch=0,
            grid=(rows_pad // tile_rows,),
            in_specs=[
                pl.BlockSpec((tile_rows, LANES), lambda i: (i, 0)),   # voxels
                pl.BlockSpec((tile_rows, LANES), lambda i: (0, 0)),   # gaussian tile (constant)
                smem_spec,   # w1       [HIDDEN]
                smem_spec,   # b1 + ctx [HIDDEN]
                smem_spec,   # w2       [HIDDEN*NUM_CLASSES]
                smem_spec,   # b2       [NUM_CLASSES]
            ],
            out_specs=pl.BlockSpec((NUM_CLASSES, tile_rows, LANES),
                                   lambda i: (0, i, 0)),
        ),
        compiler_params=pltpu.CompilerParams(
            dimension_semantics=("parallel",),
            vmem_limit_bytes=32 * 1024 * 1024,   # well under v7x's 64 MiB physical VMEM
        ),
    )(x2d, gw_tile, w1_vec, bias_eff_vec, w2_flat, b2_vec)

    # padded tail rows are computed from zero-padded x and sliced off here
    return out.reshape(NUM_CLASSES, n_pad)[:, :n]


# ------------------------- guidance -> points/labels -------------------------

def guidance_to_point_and_label_vista_fast(guidance):
    """Exact JAX port of VISTANetwork.guidance_to_point_and_label_vista_fast.

    Note: like the original PyTorch code, bg_points_raw is unconditionally
    overwritten with zeros after being (optionally) concatenated into the
    lesion point list — this matches the reference semantics on purpose.
    """
    bg = guidance["background"]   # [B, n_bg, 4]
    les = guidance["lesion"]      # [B, n_lesion, 4]
    n_bg = bg.shape[1] if bg.shape[1] > 0 else 0
    n_lesion = les.shape[1] if les.shape[1] > 0 else 0
    max_points = n_bg + n_lesion

    bg_points_raw = bg[..., 1:] if bg.shape[1] > 0 else None
    lesion_points_raw = les[..., 1:] if les.shape[1] > 0 else None

    if lesion_points_raw is not None:
        if bg_points_raw is not None:
            lesion_points_raw = jnp.concatenate([lesion_points_raw, bg_points_raw], axis=1)
            lesion_labels = jnp.concatenate(
                [jnp.ones((1, n_lesion), jnp.int32), jnp.zeros((1, n_bg), jnp.int32)], axis=1)
        else:
            lesion_labels = jnp.ones((1, n_lesion), jnp.int32)
    else:
        lesion_points_raw = jnp.zeros((1, max_points, 3), jnp.int32)
        lesion_labels = jnp.full((1, max_points), -1, jnp.int32)

    bg_points_raw = jnp.zeros((1, max_points, 3), jnp.int32)
    bg_labels = jnp.full((1, max_points), -1, jnp.int32)

    points = jnp.concatenate([bg_points_raw, lesion_points_raw.astype(jnp.int32)], axis=0)
    labels = jnp.concatenate([bg_labels, lesion_labels], axis=0)
    return points, labels


# --------------------- sliding-window helpers (glue) -------------------------

def gaussian_importance_map(patch_size, sigma_scale=0.125):
    grids = np.meshgrid(*[np.arange(s, dtype=np.float32) for s in patch_size], indexing="ij")
    m = np.ones(patch_size, dtype=np.float32)
    for g, s in zip(grids, patch_size):
        c = (s - 1) / 2.0
        sg = max(s * sigma_scale, 1e-3)
        m = m * np.exp(-0.5 * ((g - c) / sg) ** 2)
    m = m / m.max()
    m = np.clip(m, 1e-3, None)
    return jnp.asarray(m)


def sliding_window_starts(image_size, roi_size, overlap):
    starts = []
    for i_s, r_s in zip(image_size, roi_size):
        if r_s >= i_s:
            starts.append([0])
            continue
        interval = max(int(r_s * (1 - overlap)), 1)
        num = int(np.ceil((i_s - r_s) / interval)) + 1
        ss = sorted(set(min(k * interval, i_s - r_s) for k in range(num)))
        starts.append(ss)
    return starts


# ------------------------------ parameters ----------------------------------

def init_params(key, c_in=1):
    k1, k2, k3, k4 = jax.random.split(key, 4)
    w1 = (jax.random.normal(k1, (c_in, HIDDEN), jnp.float32) * 0.2)
    b1 = jnp.zeros((1, HIDDEN), jnp.float32)
    w2 = (jax.random.normal(k2, (HIDDEN, NUM_CLASSES), jnp.float32) * 0.2)
    b2 = jnp.zeros((1, NUM_CLASSES), jnp.float32)
    label_embed = jax.random.normal(k3, (3, HIDDEN), jnp.float32) * 0.1   # labels -1/0/1
    w_pt = jax.random.normal(k4, (3, HIDDEN), jnp.float32) * 0.01         # coord embed
    return dict(w1=w1, b1=b1, w2=w2, b2=b2, label_embed=label_embed, w_pt=w_pt)


def point_context(points, labels, prompt_class, params):
    """Synthetic stand-in for the VISTA point/class prompt encoder."""
    lab_emb = jnp.take(params["label_embed"], labels + 1, axis=0)         # [2, N, HIDDEN]
    pt_emb = points.astype(jnp.float32) @ params["w_pt"]                  # [2, N, HIDDEN]
    ctx = jnp.mean(lab_emb + pt_emb, axis=(0, 1))                         # [HIDDEN]
    cls_idx = jnp.clip(prompt_class[:, 0] + 1, 0, 2)
    cls_emb = jnp.take(params["label_embed"], cls_idx, axis=0).mean(0)    # [HIDDEN]
    return (ctx + cls_emb).reshape(1, HIDDEN)


# ------------------------------ forward pass ---------------------------------

def vista_forward(x_dict, params, patch_size=PATCH_SIZE, overlap=OVERLAP,
                  label_set=LABEL_SET):
    # image = torch.unsqueeze(x['image'][:, 0, :], dim=1)  -> [B, 1, H, W, D]
    image = x_dict["image"][:, 0:1, :].astype(jnp.float32)
    guidance = x_dict["guidance"]

    # interactive path (automatic_inference=False in the reference default)
    point, point_label = guidance_to_point_and_label_vista_fast(guidance)
    prompt_class = jnp.array([[l] for l in label_set], dtype=jnp.int32)
    ctx = point_context(point, point_label, prompt_class, params)         # [1, HIDDEN]

    # pre-fuse prompt context into the first-layer bias (one-time 32-element add)
    bias_eff = (params["b1"] + ctx).reshape(HIDDEN)
    w1_vec = params["w1"].reshape(HIDDEN)                                 # C_in == 1
    w2_flat = params["w2"].reshape(HIDDEN * NUM_CLASSES)
    b2_vec = params["b2"].reshape(NUM_CLASSES)

    B, C, H, W, D = image.shape
    assert C == 1
    ph, pw, pd = patch_size
    V = ph * pw * pd
    gmap = gaussian_importance_map(patch_size)                            # [ph, pw, pd]
    gmap_flat = gmap.reshape(V)

    # sliding-window start positions -> flat voxel indices for ALL patches at once
    starts_h, starts_w, starts_d = sliding_window_starts((H, W, D), patch_size, overlap)
    gh, gw_, gd = np.meshgrid(np.asarray(starts_h), np.asarray(starts_w),
                              np.asarray(starts_d), indexing="ij")
    p_start = np.stack([gh.ravel(), gw_.ravel(), gd.ravel()], axis=1)     # [P, 3]
    P = p_start.shape[0]

    hh = p_start[:, 0:1] + np.arange(ph)[None, :]                         # [P, ph]
    ww = p_start[:, 1:2] + np.arange(pw)[None, :]                         # [P, pw]
    dd = p_start[:, 2:3] + np.arange(pd)[None, :]                         # [P, pd]
    flat_idx_np = (hh[:, :, None, None] * (W * D)
                   + ww[:, None, :, None] * D
                   + dd[:, None, None, :]).astype(np.int32)               # [P, ph, pw, pd]
    flat_idx = jnp.asarray(flat_idx_np.reshape(-1))                       # [P*V]

    # normalization map (sum of gaussian weights per voxel) — batch independent,
    # built once with a single scatter-add
    cnt = jnp.zeros((H * W * D,), jnp.float32).at[flat_idx].add(
        jnp.broadcast_to(gmap_flat[None, :], (P, V)).reshape(-1))

    # TODO(synk): a fully fused version would DMA patches straight from the HBM
    # volume inside the kernel via scalar-prefetched start offsets and accumulate
    # into an aliased output; here gather/scatter are single batched XLA ops.
    outputs = []
    for b in range(B):
        vol = image[b, 0].reshape(-1)                                     # [H*W*D]
        xs = jnp.take(vol, flat_idx)                                      # one gather: [P*V]

        # hot path: per-voxel prompt-conditioned MLP + gaussian weighting (Pallas)
        logits_w = run_predictor(xs, gmap_flat, w1_vec, bias_eff,
                                 w2_flat, b2_vec)                         # [NC, P*V]

        # sliding-window accumulation: one batched scatter-add + normalization
        acc = jnp.zeros((NUM_CLASSES, H * W * D), jnp.float32)
        acc = acc.at[:, flat_idx].add(logits_w)
        outputs.append((acc / cnt[None, :]).reshape(NUM_CLASSES, H, W, D))

    return jnp.stack(outputs, axis=0)                                     # [B, NC, H, W, D]


# --------------------------------- main --------------------------------------

if __name__ == "__main__":
    key = jax.random.PRNGKey(0)
    k_img, k_bg, k_les, k_par = jax.random.split(key, 4)

    B, C_IMG, H, W, D = 1, 2, 16, 16, 8
    image = jax.random.normal(k_img, (B, C_IMG, H, W, D), jnp.float32)

    n_bg, n_lesion = 2, 3
    bg = jnp.concatenate(
        [jnp.zeros((1, n_bg, 1), jnp.int32),
         jax.random.randint(k_bg, (1, n_bg, 3), 0, min(H, W, D))], axis=-1)
    lesion = jnp.concatenate(
        [jnp.zeros((1, n_lesion, 1), jnp.int32),
         jax.random.randint(k_les, (1, n_lesion, 3), 0, min(H, W, D))], axis=-1)

    x_dict = {"image": image, "guidance": {"background": bg, "lesion": lesion}}
    params = init_params(k_par, c_in=1)

    out = vista_forward(x_dict, params)
    out = jax.block_until_ready(out)

    assert out.shape == (B, NUM_CLASSES, H, W, D), out.shape
    assert bool(jnp.all(jnp.isfinite(out)))
    print("KERNEL_OK")
</pallas_src>

<mosaic_0001>
module attributes {stable_mosaic.version = 11 : i64} {
  func.func @_predictor_kernel(%arg0: i32, %arg1: memref<32x128xf32, #tpu.memory_space<vmem>>, %arg2: memref<32x128xf32, #tpu.memory_space<vmem>>, %arg3: memref<32xf32, #tpu.memory_space<smem>>, %arg4: memref<32xf32, #tpu.memory_space<smem>>, %arg5: memref<64xf32, #tpu.memory_space<smem>>, %arg6: memref<2xf32, #tpu.memory_space<smem>>, %arg7: memref<2x32x128xf32, #tpu.memory_space<vmem>>) attributes {dimension_semantics = [#tpu.dimension_semantics<parallel>], iteration_bounds = array<i64: 2>, scalar_prefetch = 0 : i64, scratch_operands = 0 : i64, tpu.core_type = #tpu.core_type<tc>, window_params = [{transform_indices = @transform_0, window_bounds = array<i64: 32, 128>}, {pipeline_mode = #tpu.pipeline_mode<synchronous>, transform_indices = @transform_1, window_bounds = array<i64: 32, 128>}, {transform_indices = @transform_2, window_bounds = array<i64: 32>}, {transform_indices = @transform_3, window_bounds = array<i64: 32>}, {transform_indices = @transform_4, window_bounds = array<i64: 64>}, {transform_indices = @transform_5, window_bounds = array<i64: 2>}, {transform_indices = @transform_6, window_bounds = array<i64: 2, 32, 128>}]} {
    %c0 = arith.constant 0 : index
    %c0_0 = arith.constant 0 : index
    %0 = vector.load %arg1[%c0, %c0_0] : memref<32x128xf32, #tpu.memory_space<vmem>>, vector<32x128xf32>
    %c0_1 = arith.constant 0 : index
    %c0_2 = arith.constant 0 : index
    %1 = vector.load %arg2[%c0_1, %c0_2] : memref<32x128xf32, #tpu.memory_space<vmem>>, vector<32x128xf32>
    %cst = arith.constant 0.000000e+00 : f32
    %2 = vector.broadcast %cst : f32 to vector<32x128xf32>
    %c0_3 = arith.constant 0 : index
    %3 = memref.load %arg6[%c0_3] : memref<2xf32, #tpu.memory_space<smem>>
    %4 = vector.broadcast %3 : f32 to vector<32x128xf32>
    %5 = arith.addf %2, %4 : vector<32x128xf32>
    %cst_4 = arith.constant 0.000000e+00 : f32
    %6 = vector.broadcast %cst_4 : f32 to vector<32x128xf32>
    %c1 = arith.constant 1 : index
    %7 = memref.load %arg6[%c1] : memref<2xf32, #tpu.memory_space<smem>>
    %8 = vector.broadcast %7 : f32 to vector<32x128xf32>
    %9 = arith.addf %6, %8 : vector<32x128xf32>
    %c0_5 = arith.constant 0 : index
    %10 = memref.load %arg3[%c0_5] : memref<32xf32, #tpu.memory_space<smem>>
    %11 = vector.broadcast %10 : f32 to vector<32x128xf32>
    %12 = arith.mulf %0, %11 : vector<32x128xf32>
    %c0_6 = arith.constant 0 : index
    %13 = memref.load %arg4[%c0_6] : memref<32xf32, #tpu.memory_space<smem>>
    %14 = vector.broadcast %13 : f32 to vector<32x128xf32>
    %15 = arith.addf %12, %14 : vector<32x128xf32>
    %cst_7 = arith.constant 0.000000e+00 : f32
    %16 = vector.broadcast %cst_7 : f32 to vector<32x128xf32>
    %17 = arith.maximumf %15, %16 : vector<32x128xf32>
    %c0_8 = arith.constant 0 : index
    %18 = memref.load %arg5[%c0_8] : memref<64xf32, #tpu.memory_space<smem>>
    %19 = vector.broadcast %18 : f32 to vector<32x128xf32>
    %20 = arith.mulf %17, %19 : vector<32x128xf32>
    %21 = arith.addf %5, %20 : vector<32x128xf32>
    %c1_9 = arith.constant 1 : index
    %22 = memref.load %arg5[%c1_9] : memref<64xf32, #tpu.memory_space<smem>>
    %23 = vector.broadcast %22 : f32 to vector<32x128xf32>
    %24 = arith.mulf %17, %23 : vector<32x128xf32>
    %25 = arith.addf %9, %24 : vector<32x128xf32>
    %c1_10 = arith.constant 1 : index
    %26 = memref.load %arg3[%c1_10] : memref<32xf32, #tpu.memory_space<smem>>
    %27 = vector.broadcast %26 : f32 to vector<32x128xf32>
    %28 = arith.mulf %0, %27 : vector<32x128xf32>
    %c1_11 = arith.constant 1 : index
    %29 = memref.load %arg4[%c1_11] : memref<32xf32, #tpu.memory_space<smem>>
    %30 = vector.broadcast %29 : f32 to vector<32x128xf32>
    %31 = arith.addf %28, %30 : vector<32x128xf32>
    %cst_12 = arith.constant 0.000000e+00 : f32
    %32 = vector.broadcast %cst_12 : f32 to vector<32x128xf32>
    %33 = arith.maximumf %31, %32 : vector<32x128xf32>
    %c2 = arith.constant 2 : index
    %34 = memref.load %arg5[%c2] : memref<64xf32, #tpu.memory_space<smem>>
    %35 = vector.broadcast %34 : f32 to vector<32x128xf32>
    %36 = arith.mulf %33, %35 : vector<32x128xf32>
    %37 = arith.addf %21, %36 : vector<32x128xf32>
    %c3 = arith.constant 3 : index
    %38 = memref.load %arg5[%c3] : memref<64xf32, #tpu.memory_space<smem>>
    %39 = vector.broadcast %38 : f32 to vector<32x128xf32>
    %40 = arith.mulf %33, %39 : vector<32x128xf32>
    %41 = arith.addf %25, %40 : vector<32x128xf32>
    %c2_13 = arith.constant 2 : index
    %42 = memref.load %arg3[%c2_13] : memref<32xf32, #tpu.memory_space<smem>>
    %43 = vector.broadcast %42 : f32 to vector<32x128xf32>
    %44 = arith.mulf %0, %43 : vector<32x128xf32>
    %c2_14 = arith.constant 2 : index
    %45 = memref.load %arg4[%c2_14] : memref<32xf32, #tpu.memory_space<smem>>
    %46 = vector.broadcast %45 : f32 to vector<32x128xf32>
    %47 = arith.addf %44, %46 : vector<32x128xf32>
    %cst_15 = arith.constant 0.000000e+00 : f32
    %48 = vector.broadcast %cst_15 : f32 to vector<32x128xf32>
    %49 = arith.maximumf %47, %48 : vector<32x128xf32>
    %c4 = arith.constant 4 : index
    %50 = memref.load %arg5[%c4] : memref<64xf32, #tpu.memory_space<smem>>
    %51 = vector.broadcast %50 : f32 to vector<32x128xf32>
    %52 = arith.mulf %49, %51 : vector<32x128xf32>
    %53 = arith.addf %37, %52 : vector<32x128xf32>
    %c5 = arith.constant 5 : index
    %54 = memref.load %arg5[%c5] : memref<64xf32, #tpu.memory_space<smem>>
    %55 = vector.broadcast %54 : f32 to vector<32x128xf32>
    %56 = arith.mulf %49, %55 : vector<32x128xf32>
    %57 = arith.addf %41, %56 : vector<32x128xf32>
    %c3_16 = arith.constant 3 : index
    %58 = memref.load %arg3[%c3_16] : memref<32xf32, #tpu.memory_space<smem>>
    %59 = vector.broadcast %58 : f32 to vector<32x128xf32>
    %60 = arith.mulf %0, %59 : vector<32x128xf32>
    %c3_17 = arith.constant 3 : index
    %61 = memref.load %arg4[%c3_17] : memref<32xf32, #tpu.memory_space<smem>>
    %62 = vector.broadcast %61 : f32 to vector<32x128xf32>
    %63 = arith.addf %60, %62 : vector<32x128xf32>
    %cst_18 = arith.constant 0.000000e+00 : f32
    %64 = vector.broadcast %cst_18 : f32 to vector<32x128xf32>
    %65 = arith.maximumf %63, %64 : vector<32x128xf32>
    %c6 = arith.constant 6 : index
    %66 = memref.load %arg5[%c6] : memref<64xf32, #tpu.memory_space<smem>>
    %67 = vector.broadcast %66 : f32 to vector<32x128xf32>
    %68 = arith.mulf %65, %67 : vector<32x128xf32>
    %69 = arith.addf %53, %68 : vector<32x128xf32>
    %c7 = arith.constant 7 : index
    %70 = memref.load %arg5[%c7] : memref<64xf32, #tpu.memory_space<smem>>
    %71 = vector.broadcast %70 : f32 to vector<32x128xf32>
    %72 = arith.mulf %65, %71 : vector<32x128xf32>
    %73 = arith.addf %57, %72 : vector<32x128xf32>
    %c4_19 = arith.constant 4 : index
    %74 = memref.load %arg3[%c4_19] : memref<32xf32, #tpu.memory_space<smem>>
    %75 = vector.broadcast %74 : f32 to vector<32x128xf32>
    %76 = arith.mulf %0, %75 : vector<32x128xf32>
    %c4_20 = arith.constant 4 : index
    %77 = memref.load %arg4[%c4_20] : memref<32xf32, #tpu.memory_space<smem>>
    %78 = vector.broadcast %77 : f32 to vector<32x128xf32>
    %79 = arith.addf %76, %78 : vector<32x128xf32>
    %cst_21 = arith.constant 0.000000e+00 : f32
    %80 = vector.broadcast %cst_21 : f32 to vector<32x128xf32>
    %81 = arith.maximumf %79, %80 : vector<32x128xf32>
    %c8 = arith.constant 8 : index
    %82 = memref.load %arg5[%c8] : memref<64xf32, #tpu.memory_space<smem>>
    %83 = vector.broadcast %82 : f32 to vector<32x128xf32>
    %84 = arith.mulf %81, %83 : vector<32x128xf32>
    %85 = arith.addf %69, %84 : vector<32x128xf32>
    %c9 = arith.constant 9 : index
    %86 = memref.load %arg5[%c9] : memref<64xf32, #tpu.memory_space<smem>>
    %87 = vector.broadcast %86 : f32 to vector<32x128xf32>
    %88 = arith.mulf %81, %87 : vector<32x128xf32>
    %89 = arith.addf %73, %88 : vector<32x128xf32>
    %c5_22 = arith.constant 5 : index
    %90 = memref.load %arg3[%c5_22] : memref<32xf32, #tpu.memory_space<smem>>
    %91 = vector.broadcast %90 : f32 to vector<32x128xf32>
    %92 = arith.mulf %0, %91 : vector<32x128xf32>
    %c5_23 = arith.constant 5 : index
    %93 = memref.load %arg4[%c5_23] : memref<32xf32, #tpu.memory_space<smem>>
    %94 = vector.broadcast %93 : f32 to vector<32x128xf32>
    %95 = arith.addf %92, %94 : vector<32x128xf32>
    %cst_24 = arith.constant 0.000000e+00 : f32
    %96 = vector.broadcast %cst_24 : f32 to vector<32x128xf32>
    %97 = arith.maximumf %95, %96 : vector<32x128xf32>
    %c10 = arith.constant 10 : index
    %98 = memref.load %arg5[%c10] : memref<64xf32, #tpu.memory_space<smem>>
    %99 = vector.broadcast %98 : f32 to vector<32x128xf32>
    %100 = arith.mulf %97, %99 : vector<32x128xf32>
    %101 = arith.addf %85, %100 : vector<32x128xf32>
    %c11 = arith.constant 11 : index
    %102 = memref.load %arg5[%c11] : memref<64xf32, #tpu.memory_space<smem>>
    %103 = vector.broadcast %102 : f32 to vector<32x128xf32>
    %104 = arith.mulf %97, %103 : vector<32x128xf32>
    %105 = arith.addf %89, %104 : vector<32x128xf32>
    %c6_25 = arith.constant 6 : index
    %106 = memref.load %arg3[%c6_25] : memref<32xf32, #tpu.memory_space<smem>>
    %107 = vector.broadcast %106 : f32 to vector<32x128xf32>
    %108 = arith.mulf %0, %107 : vector<32x128xf32>
    %c6_26 = arith.constant 6 : index
    %109 = memref.load %arg4[%c6_26] : memref<32xf32, #tpu.memory_space<smem>>
    %110 = vector.broadcast %109 : f32 to vector<32x128xf32>
    %111 = arith.addf %108, %110 : vector<32x128xf32>
    %cst_27 = arith.constant 0.000000e+00 : f32
    %112 = vector.broadcast %cst_27 : f32 to vector<32x128xf32>
    %113 = arith.maximumf %111, %112 : vector<32x128xf32>
    %c12 = arith.constant 12 : index
    %114 = memref.load %arg5[%c12] : memref<64xf32, #tpu.memory_space<smem>>
    %115 = vector.broadcast %114 : f32 to vector<32x128xf32>
    %116 = arith.mulf %113, %115 : vector<32x128xf32>
    %117 = arith.addf %101, %116 : vector<32x128xf32>
    %c13 = arith.constant 13 : index
    %118 = memref.load %arg5[%c13] : memref<64xf32, #tpu.memory_space<smem>>
    %119 = vector.broadcast %118 : f32 to vector<32x128xf32>
    %120 = arith.mulf %113, %119 : vector<32x128xf32>
    %121 = arith.addf %105, %120 : vector<32x128xf32>
    %c7_28 = arith.constant 7 : index
    %122 = memref.load %arg3[%c7_28] : memref<32xf32, #tpu.memory_space<smem>>
    %123 = vector.broadcast %122 : f32 to vector<32x128xf32>
    %124 = arith.mulf %0, %123 : vector<32x128xf32>
    %c7_29 = arith.constant 7 : index
    %125 = memref.load %arg4[%c7_29] : memref<32xf32, #tpu.memory_space<smem>>
    %126 = vector.broadcast %125 : f32 to vector<32x128xf32>
    %127 = arith.addf %124, %126 : vector<32x128xf32>
    %cst_30 = arith.constant 0.000000e+00 : f32
    %128 = vector.broadcast %cst_30 : f32 to vector<32x128xf32>
    %129 = arith.maximumf %127, %128 : vector<32x128xf32>
    %c14 = arith.constant 14 : index
    %130 = memref.load %arg5[%c14] : memref<64xf32, #tpu.memory_space<smem>>
    %131 = vector.broadcast %130 : f32 to vector<32x128xf32>
    %132 = arith.mulf %129, %131 : vector<32x128xf32>
    %133 = arith.addf %117, %132 : vector<32x128xf32>
    %c15 = arith.constant 15 : index
    %134 = memref.load %arg5[%c15] : memref<64xf32, #tpu.memory_space<smem>>
    %135 = vector.broadcast %134 : f32 to vector<32x128xf32>
    %136 = arith.mulf %129, %135 : vector<32x128xf32>
    %137 = arith.addf %121, %136 : vector<32x128xf32>
    %c8_31 = arith.constant 8 : index
    %138 = memref.load %arg3[%c8_31] : memref<32xf32, #tpu.memory_space<smem>>
    %139 = vector.broadcast %138 : f32 to vector<32x128xf32>
    %140 = arith.mulf %0, %139 : vector<32x128xf32>
    %c8_32 = arith.constant 8 : index
    %141 = memref.load %arg4[%c8_32] : memref<32xf32, #tpu.memory_space<smem>>
    %142 = vector.broadcast %141 : f32 to vector<32x128xf32>
    %143 = arith.addf %140, %142 : vector<32x128xf32>
    %cst_33 = arith.constant 0.000000e+00 : f32
    %144 = vector.broadcast %cst_33 : f32 to vector<32x128xf32>
    %145 = arith.maximumf %143, %144 : vector<32x128xf32>
    %c16 = arith.constant 16 : index
    %146 = memref.load %arg5[%c16] : memref<64xf32, #tpu.memory_space<smem>>
    %147 = vector.broadcast %146 : f32 to vector<32x128xf32>
    %148 = arith.mulf %145, %147 : vector<32x128xf32>
    %149 = arith.addf %133, %148 : vector<32x128xf32>
    %c17 = arith.constant 17 : index
    %150 = memref.load %arg5[%c17] : memref<64xf32, #tpu.memory_space<smem>>
    %151 = vector.broadcast %150 : f32 to vector<32x128xf32>
    %152 = arith.mulf %145, %151 : vector<32x128xf32>
    %153 = arith.addf %137, %152 : vector<32x128xf32>
    %c9_34 = arith.constant 9 : index
    %154 = memref.load %arg3[%c9_34] : memref<32xf32, #tpu.memory_space<smem>>
    %155 = vector.broadcast %154 : f32 to vector<32x128xf32>
    %156 = arith.mulf %0, %155 : vector<32x128xf32>
    %c9_35 = arith.constant 9 : index
    %157 = memref.load %arg4[%c9_35] : memref<32xf32, #tpu.memory_space<smem>>
    %158 = vector.broadcast %157 : f32 to vector<32x128xf32>
    %159 = arith.addf %156, %158 : vector<32x128xf32>
    %cst_36 = arith.constant 0.000000e+00 : f32
    %160 = vector.broadcast %cst_36 : f32 to vector<32x128xf32>
    %161 = arith.maximumf %159, %160 : vector<32x128xf32>
    %c18 = arith.constant 18 : index
    %162 = memref.load %arg5[%c18] : memref<64xf32, #tpu.memory_space<smem>>
    %163 = vector.broadcast %162 : f32 to vector<32x128xf32>
    %164 = arith.mulf %161, %163 : vector<32x128xf32>
    %165 = arith.addf %149, %164 : vector<32x128xf32>
    %c19 = arith.constant 19 : index
    %166 = memref.load %arg5[%c19] : memref<64xf32, #tpu.memory_space<smem>>
    %167 = vector.broadcast %166 : f32 to vector<32x128xf32>
    %168 = arith.mulf %161, %167 : vector<32x128xf32>
    %169 = arith.addf %153, %168 : vector<32x128xf32>
    %c10_37 = arith.constant 10 : index
    %170 = memref.load %arg3[%c10_37] : memref<32xf32, #tpu.memory_space<smem>>
    %171 = vector.broadcast %170 : f32 to vector<32x128xf32>
    %172 = arith.mulf %0, %171 : vector<32x128xf32>
    %c10_38 = arith.constant 10 : index
    %173 = memref.load %arg4[%c10_38] : memref<32xf32, #tpu.memory_space<smem>>
    %174 = vector.broadcast %173 : f32 to vector<32x128xf32>
    %175 = arith.addf %172, %174 : vector<32x128xf32>
    %cst_39 = arith.constant 0.000000e+00 : f32
    %176 = vector.broadcast %cst_39 : f32 to vector<32x128xf32>
    %177 = arith.maximumf %175, %176 : vector<32x128xf32>
    %c20 = arith.constant 20 : index
    %178 = memref.load %arg5[%c20] : memref<64xf32, #tpu.memory_space<smem>>
    %179 = vector.broadcast %178 : f32 to vector<32x128xf32>
    %180 = arith.mulf %177, %179 : vector<32x128xf32>
    %181 = arith.addf %165, %180 : vector<32x128xf32>
    %c21 = arith.constant 21 : index
    %182 = memref.load %arg5[%c21] : memref<64xf32, #tpu.memory_space<smem>>
    %183 = vector.broadcast %182 : f32 to vector<32x128xf32>
    %184 = arith.mulf %177, %183 : vector<32x128xf32>
    %185 = arith.addf %169, %184 : vector<32x128xf32>
    %c11_40 = arith.constant 11 : index
    %186 = memref.load %arg3[%c11_40] : memref<32xf32, #tpu.memory_space<smem>>
    %187 = vector.broadcast %186 : f32 to vector<32x128xf32>
    %188 = arith.mulf %0, %187 : vector<32x128xf32>
    %c11_41 = arith.constant 11 : index
    %189 = memref.load %arg4[%c11_41] : memref<32xf32, #tpu.memory_space<smem>>
    %190 = vector.broadcast %189 : f32 to vector<32x128xf32>
    %191 = arith.addf %188, %190 : vector<32x128xf32>
    %cst_42 = arith.constant 0.000000e+00 : f32
    %192 = vector.broadcast %cst_42 : f32 to vector<32x128xf32>
    %193 = arith.maximumf %191, %192 : vector<32x128xf32>
    %c22 = arith.constant 22 : index
    %194 = memref.load %arg5[%c22] : memref<64xf32, #tpu.memory_space<smem>>
    %195 = vector.broadcast %194 : f32 to vector<32x128xf32>
    %196 = arith.mulf %193, %195 : vector<32x128xf32>
    %197 = arith.addf %181, %196 : vector<32x128xf32>
    %c23 = arith.constant 23 : index
    %198 = memref.load %arg5[%c23] : memref<64xf32, #tpu.memory_space<smem>>
    %199 = vector.broadcast %198 : f32 to vector<32x128xf32>
    %200 = arith.mulf %193, %199 : vector<32x128xf32>
    %201 = arith.addf %185, %200 : vector<32x128xf32>
    %c12_43 = arith.constant 12 : index
    %202 = memref.load %arg3[%c12_43] : memref<32xf32, #tpu.memory_space<smem>>
    %203 = vector.broadcast %202 : f32 to vector<32x128xf32>
    %204 = arith.mulf %0, %203 : vector<32x128xf32>
    %c12_44 = arith.constant 12 : index
    %205 = memref.load %arg4[%c12_44] : memref<32xf32, #tpu.memory_space<smem>>
    %206 = vector.broadcast %205 : f32 to vector<32x128xf32>
    %207 = arith.addf %204, %206 : vector<32x128xf32>
    %cst_45 = arith.constant 0.000000e+00 : f32
    %208 = vector.broadcast %cst_45 : f32 to vector<32x128xf32>
    %209 = arith.maximumf %207, %208 : vector<32x128xf32>
    %c24 = arith.constant 24 : index
    %210 = memref.load %arg5[%c24] : memref<64xf32, #tpu.memory_space<smem>>
    %211 = vector.broadcast %210 : f32 to vector<32x128xf32>
    %212 = arith.mulf %209, %211 : vector<32x128xf32>
    %213 = arith.addf %197, %212 : vector<32x128xf32>
    %c25 = arith.constant 25 : index
    %214 = memref.load %arg5[%c25] : memref<64xf32, #tpu.memory_space<smem>>
    %215 = vector.broadcast %214 : f32 to vector<32x128xf32>
    %216 = arith.mulf %209, %215 : vector<32x128xf32>
    %217 = arith.addf %201, %216 : vector<32x128xf32>
    %c13_46 = arith.constant 13 : index
    %218 = memref.load %arg3[%c13_46] : memref<32xf32, #tpu.memory_space<smem>>
    %219 = vector.broadcast %218 : f32 to vector<32x128xf32>
    %220 = arith.mulf %0, %219 : vector<32x128xf32>
    %c13_47 = arith.constant 13 : index
    %221 = memref.load %arg4[%c13_47] : memref<32xf32, #tpu.memory_space<smem>>
    %222 = vector.broadcast %221 : f32 to vector<32x128xf32>
    %223 = arith.addf %220, %222 : vector<32x128xf32>
    %cst_48 = arith.constant 0.000000e+00 : f32
    %224 = vector.broadcast %cst_48 : f32 to vector<32x128xf32>
    %225 = arith.maximumf %223, %224 : vector<32x128xf32>
    %c26 = arith.constant 26 : index
    %226 = memref.load %arg5[%c26] : memref<64xf32, #tpu.memory_space<smem>>
    %227 = vector.broadcast %226 : f32 to vector<32x128xf32>
    %228 = arith.mulf %225, %227 : vector<32x128xf32>
    %229 = arith.addf %213, %228 : vector<32x128xf32>
    %c27 = arith.constant 27 : index
    %230 = memref.load %arg5[%c27] : memref<64xf32, #tpu.memory_space<smem>>
    %231 = vector.broadcast %230 : f32 to vector<32x128xf32>
    %232 = arith.mulf %225, %231 : vector<32x128xf32>
    %233 = arith.addf %217, %232 : vector<32x128xf32>
    %c14_49 = arith.constant 14 : index
    %234 = memref.load %arg3[%c14_49] : memref<32xf32, #tpu.memory_space<smem>>
    %235 = vector.broadcast %234 : f32 to vector<32x128xf32>
    %236 = arith.mulf %0, %235 : vector<32x128xf32>
    %c14_50 = arith.constant 14 : index
    %237 = memref.load %arg4[%c14_50] : memref<32xf32, #tpu.memory_space<smem>>
    %238 = vector.broadcast %237 : f32 to vector<32x128xf32>
    %239 = arith.addf %236, %238 : vector<32x128xf32>
    %cst_51 = arith.constant 0.000000e+00 : f32
    %240 = vector.broadcast %cst_51 : f32 to vector<32x128xf32>
    %241 = arith.maximumf %239, %240 : vector<32x128xf32>
    %c28 = arith.constant 28 : index
    %242 = memref.load %arg5[%c28] : memref<64xf32, #tpu.memory_space<smem>>
    %243 = vector.broadcast %242 : f32 to vector<32x128xf32>
    %244 = arith.mulf %241, %243 : vector<32x128xf32>
    %245 = arith.addf %229, %244 : vector<32x128xf32>
    %c29 = arith.constant 29 : index
    %246 = memref.load %arg5[%c29] : memref<64xf32, #tpu.memory_space<smem>>
    %247 = vector.broadcast %246 : f32 to vector<32x128xf32>
    %248 = arith.mulf %241, %247 : vector<32x128xf32>
    %249 = arith.addf %233, %248 : vector<32x128xf32>
    %c15_52 = arith.constant 15 : index
    %250 = memref.load %arg3[%c15_52] : memref<32xf32, #tpu.memory_space<smem>>
    %251 = vector.broadcast %250 : f32 to vector<32x128xf32>
    %252 = arith.mulf %0, %251 : vector<32x128xf32>
    %c15_53 = arith.constant 15 : index
    %253 = memref.load %arg4[%c15_53] : memref<32xf32, #tpu.memory_space<smem>>
    %254 = vector.broadcast %253 : f32 to vector<32x128xf32>
    %255 = arith.addf %252, %254 : vector<32x128xf32>
    %cst_54 = arith.constant 0.000000e+00 : f32
    %256 = vector.broadcast %cst_54 : f32 to vector<32x128xf32>
    %257 = arith.maximumf %255, %256 : vector<32x128xf32>
    %c30 = arith.constant 30 : index
    %258 = memref.load %arg5[%c30] : memref<64xf32, #tpu.memory_space<smem>>
    %259 = vector.broadcast %258 : f32 to vector<32x128xf32>
    %260 = arith.mulf %257, %259 : vector<32x128xf32>
    %261 = arith.addf %245, %260 : vector<32x128xf32>
    %c31 = arith.constant 31 : index
    %262 = memref.load %arg5[%c31] : memref<64xf32, #tpu.memory_space<smem>>
    %263 = vector.broadcast %262 : f32 to vector<32x128xf32>
    %264 = arith.mulf %257, %263 : vector<32x128xf32>
    %265 = arith.addf %249, %264 : vector<32x128xf32>
    %c16_55 = arith.constant 16 : index
    %266 = memref.load %arg3[%c16_55] : memref<32xf32, #tpu.memory_space<smem>>
    %267 = vector.broadcast %266 : f32 to vector<32x128xf32>
    %268 = arith.mulf %0, %267 : vector<32x128xf32>
    %c16_56 = arith.constant 16 : index
    %269 = memref.load %arg4[%c16_56] : memref<32xf32, #tpu.memory_space<smem>>
    %270 = vector.broadcast %269 : f32 to vector<32x128xf32>
    %271 = arith.addf %268, %270 : vector<32x128xf32>
    %cst_57 = arith.constant 0.000000e+00 : f32
    %272 = vector.broadcast %cst_57 : f32 to vector<32x128xf32>
    %273 = arith.maximumf %271, %272 : vector<32x128xf32>
    %c32 = arith.constant 32 : index
    %274 = memref.load %arg5[%c32] : memref<64xf32, #tpu.memory_space<smem>>
    %275 = vector.broadcast %274 : f32 to vector<32x128xf32>
    %276 = arith.mulf %273, %275 : vector<32x128xf32>
    %277 = arith.addf %261, %276 : vector<32x128xf32>
    %c33 = arith.constant 33 : index
    %278 = memref.load %arg5[%c33] : memref<64xf32, #tpu.memory_space<smem>>
    %279 = vector.broadcast %278 : f32 to vector<32x128xf32>
    %280 = arith.mulf %273, %279 : vector<32x128xf32>
    %281 = arith.addf %265, %280 : vector<32x128xf32>
    %c17_58 = arith.constant 17 : index
    %282 = memref.load %arg3[%c17_58] : memref<32xf32, #tpu.memory_space<smem>>
    %283 = vector.broadcast %282 : f32 to vector<32x128xf32>
    %284 = arith.mulf %0, %283 : vector<32x128xf32>
    %c17_59 = arith.constant 17 : index
    %285 = memref.load %arg4[%c17_59] : memref<32xf32, #tpu.memory_space<smem>>
    %286 = vector.broadcast %285 : f32 to vector<32x128xf32>
    %287 = arith.addf %284, %286 : vector<32x128xf32>
    %cst_60 = arith.constant 0.000000e+00 : f32
    %288 = vector.broadcast %cst_60 : f32 to vector<32x128xf32>
    %289 = arith.maximumf %287, %288 : vector<32x128xf32>
    %c34 = arith.constant 34 : index
    %290 = memref.load %arg5[%c34] : memref<64xf32, #tpu.memory_space<smem>>
    %291 = vector.broadcast %290 : f32 to vector<32x128xf32>
    %292 = arith.mulf %289, %291 : vector<32x128xf32>
    %293 = arith.addf %277, %292 : vector<32x128xf32>
    %c35 = arith.constant 35 : index
    %294 = memref.load %arg5[%c35] : memref<64xf32, #tpu.memory_space<smem>>
    %295 = vector.broadcast %294 : f32 to vector<32x128xf32>
    %296 = arith.mulf %289, %295 : vector<32x128xf32>
    %297 = arith.addf %281, %296 : vector<32x128xf32>
    %c18_61 = arith.constant 18 : index
    %298 = memref.load %arg3[%c18_61] : memref<32xf32, #tpu.memory_space<smem>>
    %299 = vector.broadcast %298 : f32 to vector<32x128xf32>
    %300 = arith.mulf %0, %299 : vector<32x128xf32>
    %c18_62 = arith.constant 18 : index
    %301 = memref.load %arg4[%c18_62] : memref<32xf32, #tpu.memory_space<smem>>
    %302 = vector.broadcast %301 : f32 to vector<32x128xf32>
    %303 = arith.addf %300, %302 : vector<32x128xf32>
    %cst_63 = arith.constant 0.000000e+00 : f32
    %304 = vector.broadcast %cst_63 : f32 to vector<32x128xf32>
    %305 = arith.maximumf %303, %304 : vector<32x128xf32>
    %c36 = arith.constant 36 : index
    %306 = memref.load %arg5[%c36] : memref<64xf32, #tpu.memory_space<smem>>
    %307 = vector.broadcast %306 : f32 to vector<32x128xf32>
    %308 = arith.mulf %305, %307 : vector<32x128xf32>
    %309 = arith.addf %293, %308 : vector<32x128xf32>
    %c37 = arith.constant 37 : index
    %310 = memref.load %arg5[%c37] : memref<64xf32, #tpu.memory_space<smem>>
    %311 = vector.broadcast %310 : f32 to vector<32x128xf32>
    %312 = arith.mulf %305, %311 : vector<32x128xf32>
    %313 = arith.addf %297, %312 : vector<32x128xf32>
    %c19_64 = arith.constant 19 : index
    %314 = memref.load %arg3[%c19_64] : memref<32xf32, #tpu.memory_space<smem>>
    %315 = vector.broadcast %314 : f32 to vector<32x128xf32>
    %316 = arith.mulf %0, %315 : vector<32x128xf32>
    %c19_65 = arith.constant 19 : index
    %317 = memref.load %arg4[%c19_65] : memref<32xf32, #tpu.memory_space<smem>>
    %318 = vector.broadcast %317 : f32 to vector<32x128xf32>
    %319 = arith.addf %316, %318 : vector<32x128xf32>
    %cst_66 = arith.constant 0.000000e+00 : f32
    %320 = vector.broadcast %cst_66 : f32 to vector<32x128xf32>
    %321 = arith.maximumf %319, %320 : vector<32x128xf32>
    %c38 = arith.constant 38 : index
    %322 = memref.load %arg5[%c38] : memref<64xf32, #tpu.memory_space<smem>>
    %323 = vector.broadcast %322 : f32 to vector<32x128xf32>
    %324 = arith.mulf %321, %323 : vector<32x128xf32>
    %325 = arith.addf %309, %324 : vector<32x128xf32>
    %c39 = arith.constant 39 : index
    %326 = memref.load %arg5[%c39] : memref<64xf32, #tpu.memory_space<smem>>
    %327 = vector.broadcast %326 : f32 to vector<32x128xf32>
    %328 = arith.mulf %321, %327 : vector<32x128xf32>
    %329 = arith.addf %313, %328 : vector<32x128xf32>
    %c20_67 = arith.constant 20 : index
    %330 = memref.load %arg3[%c20_67] : memref<32xf32, #tpu.memory_space<smem>>
    %331 = vector.broadcast %330 : f32 to vector<32x128xf32>
    %332 = arith.mulf %0, %331 : vector<32x128xf32>
    %c20_68 = arith.constant 20 : index
    %333 = memref.load %arg4[%c20_68] : memref<32xf32, #tpu.memory_space<smem>>
    %334 = vector.broadcast %333 : f32 to vector<32x128xf32>
    %335 = arith.addf %332, %334 : vector<32x128xf32>
    %cst_69 = arith.constant 0.000000e+00 : f32
    %336 = vector.broadcast %cst_69 : f32 to vector<32x128xf32>
    %337 = arith.maximumf %335, %336 : vector<32x128xf32>
    %c40 = arith.constant 40 : index
    %338 = memref.load %arg5[%c40] : memref<64xf32, #tpu.memory_space<smem>>
    %339 = vector.broadcast %338 : f32 to vector<32x128xf32>
    %340 = arith.mulf %337, %339 : vector<32x128xf32>
    %341 = arith.addf %325, %340 : vector<32x128xf32>
    %c41 = arith.constant 41 : index
    %342 = memref.load %arg5[%c41] : memref<64xf32, #tpu.memory_space<smem>>
    %343 = vector.broadcast %342 : f32 to vector<32x128xf32>
    %344 = arith.mulf %337, %343 : vector<32x128xf32>
    %345 = arith.addf %329, %344 : vector<32x128xf32>
    %c21_70 = arith.constant 21 : index
    %346 = memref.load %arg3[%c21_70] : memref<32xf32, #tpu.memory_space<smem>>
    %347 = vector.broadcast %346 : f32 to vector<32x128xf32>
    %348 = arith.mulf %0, %347 : vector<32x128xf32>
    %c21_71 = arith.constant 21 : index
    %349 = memref.load %arg4[%c21_71] : memref<32xf32, #tpu.memory_space<smem>>
    %350 = vector.broadcast %349 : f32 to vector<32x128xf32>
    %351 = arith.addf %348, %350 : vector<32x128xf32>
    %cst_72 = arith.constant 0.000000e+00 : f32
    %352 = vector.broadcast %cst_72 : f32 to vector<32x128xf32>
    %353 = arith.maximumf %351, %352 : vector<32x128xf32>
    %c42 = arith.constant 42 : index
    %354 = memref.load %arg5[%c42] : memref<64xf32, #tpu.memory_space<smem>>
    %355 = vector.broadcast %354 : f32 to vector<32x128xf32>
    %356 = arith.mulf %353, %355 : vector<32x128xf32>
    %357 = arith.addf %341, %356 : vector<32x128xf32>
    %c43 = arith.constant 43 : index
    %358 = memref.load %arg5[%c43] : memref<64xf32, #tpu.memory_space<smem>>
    %359 = vector.broadcast %358 : f32 to vector<32x128xf32>
    %360 = arith.mulf %353, %359 : vector<32x128xf32>
    %361 = arith.addf %345, %360 : vector<32x128xf32>
    %c22_73 = arith.constant 22 : index
    %362 = memref.load %arg3[%c22_73] : memref<32xf32, #tpu.memory_space<smem>>
    %363 = vector.broadcast %362 : f32 to vector<32x128xf32>
    %364 = arith.mulf %0, %363 : vector<32x128xf32>
    %c22_74 = arith.constant 22 : index
    %365 = memref.load %arg4[%c22_74] : memref<32xf32, #tpu.memory_space<smem>>
    %366 = vector.broadcast %365 : f32 to vector<32x128xf32>
    %367 = arith.addf %364, %366 : vector<32x128xf32>
    %cst_75 = arith.constant 0.000000e+00 : f32
    %368 = vector.broadcast %cst_75 : f32 to vector<32x128xf32>
    %369 = arith.maximumf %367, %368 : vector<32x128xf32>
    %c44 = arith.constant 44 : index
    %370 = memref.load %arg5[%c44] : memref<64xf32, #tpu.memory_space<smem>>
    %371 = vector.broadcast %370 : f32 to vector<32x128xf32>
    %372 = arith.mulf %369, %371 : vector<32x128xf32>
    %373 = arith.addf %357, %372 : vector<32x128xf32>
    %c45 = arith.constant 45 : index
    %374 = memref.load %arg5[%c45] : memref<64xf32, #tpu.memory_space<smem>>
    %375 = vector.broadcast %374 : f32 to vector<32x128xf32>
    %376 = arith.mulf %369, %375 : vector<32x128xf32>
    %377 = arith.addf %361, %376 : vector<32x128xf32>
    %c23_76 = arith.constant 23 : index
    %378 = memref.load %arg3[%c23_76] : memref<32xf32, #tpu.memory_space<smem>>
    %379 = vector.broadcast %378 : f32 to vector<32x128xf32>
    %380 = arith.mulf %0, %379 : vector<32x128xf32>
    %c23_77 = arith.constant 23 : index
    %381 = memref.load %arg4[%c23_77] : memref<32xf32, #tpu.memory_space<smem>>
    %382 = vector.broadcast %381 : f32 to vector<32x128xf32>
    %383 = arith.addf %380, %382 : vector<32x128xf32>
    %cst_78 = arith.constant 0.000000e+00 : f32
    %384 = vector.broadcast %cst_78 : f32 to vector<32x128xf32>
    %385 = arith.maximumf %383, %384 : vector<32x128xf32>
    %c46 = arith.constant 46 : index
    %386 = memref.load %arg5[%c46] : memref<64xf32, #tpu.memory_space<smem>>
    %387 = vector.broadcast %386 : f32 to vector<32x128xf32>
    %388 = arith.mulf %385, %387 : vector<32x128xf32>
    %389 = arith.addf %373, %388 : vector<32x128xf32>
    %c47 = arith.constant 47 : index
    %390 = memref.load %arg5[%c47] : memref<64xf32, #tpu.memory_space<smem>>
    %391 = vector.broadcast %390 : f32 to vector<32x128xf32>
    %392 = arith.mulf %385, %391 : vector<32x128xf32>
    %393 = arith.addf %377, %392 : vector<32x128xf32>
    %c24_79 = arith.constant 24 : index
    %394 = memref.load %arg3[%c24_79] : memref<32xf32, #tpu.memory_space<smem>>
    %395 = vector.broadcast %394 : f32 to vector<32x128xf32>
    %396 = arith.mulf %0, %395 : vector<32x128xf32>
    %c24_80 = arith.constant 24 : index
    %397 = memref.load %arg4[%c24_80] : memref<32xf32, #tpu.memory_space<smem>>
    %398 = vector.broadcast %397 : f32 to vector<32x128xf32>
    %399 = arith.addf %396, %398 : vector<32x128xf32>
    %cst_81 = arith.constant 0.000000e+00 : f32
    %400 = vector.broadcast %cst_81 : f32 to vector<32x128xf32>
    %401 = arith.maximumf %399, %400 : vector<32x128xf32>
    %c48 = arith.constant 48 : index
    %402 = memref.load %arg5[%c48] : memref<64xf32, #tpu.memory_space<smem>>
    %403 = vector.broadcast %402 : f32 to vector<32x128xf32>
    %404 = arith.mulf %401, %403 : vector<32x128xf32>
    %405 = arith.addf %389, %404 : vector<32x128xf32>
    %c49 = arith.constant 49 : index
    %406 = memref.load %arg5[%c49] : memref<64xf32, #tpu.memory_space<smem>>
    %407 = vector.broadcast %406 : f32 to vector<32x128xf32>
    %408 = arith.mulf %401, %407 : vector<32x128xf32>
    %409 = arith.addf %393, %408 : vector<32x128xf32>
    %c25_82 = arith.constant 25 : index
    %410 = memref.load %arg3[%c25_82] : memref<32xf32, #tpu.memory_space<smem>>
    %411 = vector.broadcast %410 : f32 to vector<32x128xf32>
    %412 = arith.mulf %0, %411 : vector<32x128xf32>
    %c25_83 = arith.constant 25 : index
    %413 = memref.load %arg4[%c25_83] : memref<32xf32, #tpu.memory_space<smem>>
    %414 = vector.broadcast %413 : f32 to vector<32x128xf32>
    %415 = arith.addf %412, %414 : vector<32x128xf32>
    %cst_84 = arith.constant 0.000000e+00 : f32
    %416 = vector.broadcast %cst_84 : f32 to vector<32x128xf32>
    %417 = arith.maximumf %415, %416 : vector<32x128xf32>
    %c50 = arith.constant 50 : index
    %418 = memref.load %arg5[%c50] : memref<64xf32, #tpu.memory_space<smem>>
    %419 = vector.broadcast %418 : f32 to vector<32x128xf32>
    %420 = arith.mulf %417, %419 : vector<32x128xf32>
    %421 = arith.addf %405, %420 : vector<32x128xf32>
    %c51 = arith.constant 51 : index
    %422 = memref.load %arg5[%c51] : memref<64xf32, #tpu.memory_space<smem>>
    %423 = vector.broadcast %422 : f32 to vector<32x128xf32>
    %424 = arith.mulf %417, %423 : vector<32x128xf32>
    %425 = arith.addf %409, %424 : vector<32x128xf32>
    %c26_85 = arith.constant 26 : index
    %426 = memref.load %arg3[%c26_85] : memref<32xf32, #tpu.memory_space<smem>>
    %427 = vector.broadcast %426 : f32 to vector<32x128xf32>
    %428 = arith.mulf %0, %427 : vector<32x128xf32>
    %c26_86 = arith.constant 26 : index
    %429 = memref.load %arg4[%c26_86] : memref<32xf32, #tpu.memory_space<smem>>
    %430 = vector.broadcast %429 : f32 to vector<32x128xf32>
    %431 = arith.addf %428, %430 : vector<32x128xf32>
    %cst_87 = arith.constant 0.000000e+00 : f32
    %432 = vector.broadcast %cst_87 : f32 to vector<32x128xf32>
    %433 = arith.maximumf %431, %432 : vector<32x128xf32>
    %c52 = arith.constant 52 : index
    %434 = memref.load %arg5[%c52] : memref<64xf32, #tpu.memory_space<smem>>
    %435 = vector.broadcast %434 : f32 to vector<32x128xf32>
    %436 = arith.mulf %433, %435 : vector<32x128xf32>
    %437 = arith.addf %421, %436 : vector<32x128xf32>
    %c53 = arith.constant 53 : index
    %438 = memref.load %arg5[%c53] : memref<64xf32, #tpu.memory_space<smem>>
    %439 = vector.broadcast %438 : f32 to vector<32x128xf32>
    %440 = arith.mulf %433, %439 : vector<32x128xf32>
    %441 = arith.addf %425, %440 : vector<32x128xf32>
    %c27_88 = arith.constant 27 : index
    %442 = memref.load %arg3[%c27_88] : memref<32xf32, #tpu.memory_space<smem>>
    %443 = vector.broadcast %442 : f32 to vector<32x128xf32>
    %444 = arith.mulf %0, %443 : vector<32x128xf32>
    %c27_89 = arith.constant 27 : index
    %445 = memref.load %arg4[%c27_89] : memref<32xf32, #tpu.memory_space<smem>>
    %446 = vector.broadcast %445 : f32 to vector<32x128xf32>
    %447 = arith.addf %444, %446 : vector<32x128xf32>
    %cst_90 = arith.constant 0.000000e+00 : f32
    %448 = vector.broadcast %cst_90 : f32 to vector<32x128xf32>
    %449 = arith.maximumf %447, %448 : vector<32x128xf32>
    %c54 = arith.constant 54 : index
    %450 = memref.load %arg5[%c54] : memref<64xf32, #tpu.memory_space<smem>>
    %451 = vector.broadcast %450 : f32 to vector<32x128xf32>
    %452 = arith.mulf %449, %451 : vector<32x128xf32>
    %453 = arith.addf %437, %452 : vector<32x128xf32>
    %c55 = arith.constant 55 : index
    %454 = memref.load %arg5[%c55] : memref<64xf32, #tpu.memory_space<smem>>
    %455 = vector.broadcast %454 : f32 to vector<32x128xf32>
    %456 = arith.mulf %449, %455 : vector<32x128xf32>
    %457 = arith.addf %441, %456 : vector<32x128xf32>
    %c28_91 = arith.constant 28 : index
    %458 = memref.load %arg3[%c28_91] : memref<32xf32, #tpu.memory_space<smem>>
    %459 = vector.broadcast %458 : f32 to vector<32x128xf32>
    %460 = arith.mulf %0, %459 : vector<32x128xf32>
    %c28_92 = arith.constant 28 : index
    %461 = memref.load %arg4[%c28_92] : memref<32xf32, #tpu.memory_space<smem>>
    %462 = vector.broadcast %461 : f32 to vector<32x128xf32>
    %463 = arith.addf %460, %462 : vector<32x128xf32>
    %cst_93 = arith.constant 0.000000e+00 : f32
    %464 = vector.broadcast %cst_93 : f32 to vector<32x128xf32>
    %465 = arith.maximumf %463, %464 : vector<32x128xf32>
    %c56 = arith.constant 56 : index
    %466 = memref.load %arg5[%c56] : memref<64xf32, #tpu.memory_space<smem>>
    %467 = vector.broadcast %466 : f32 to vector<32x128xf32>
    %468 = arith.mulf %465, %467 : vector<32x128xf32>
    %469 = arith.addf %453, %468 : vector<32x128xf32>
    %c57 = arith.constant 57 : index
    %470 = memref.load %arg5[%c57] : memref<64xf32, #tpu.memory_space<smem>>
    %471 = vector.broadcast %470 : f32 to vector<32x128xf32>
    %472 = arith.mulf %465, %471 : vector<32x128xf32>
    %473 = arith.addf %457, %472 : vector<32x128xf32>
    %c29_94 = arith.constant 29 : index
    %474 = memref.load %arg3[%c29_94] : memref<32xf32, #tpu.memory_space<smem>>
    %475 = vector.broadcast %474 : f32 to vector<32x128xf32>
    %476 = arith.mulf %0, %475 : vector<32x128xf32>
    %c29_95 = arith.constant 29 : index
    %477 = memref.load %arg4[%c29_95] : memref<32xf32, #tpu.memory_space<smem>>
    %478 = vector.broadcast %477 : f32 to vector<32x128xf32>
    %479 = arith.addf %476, %478 : vector<32x128xf32>
    %cst_96 = arith.constant 0.000000e+00 : f32
    %480 = vector.broadcast %cst_96 : f32 to vector<32x128xf32>
    %481 = arith.maximumf %479, %480 : vector<32x128xf32>
    %c58 = arith.constant 58 : index
    %482 = memref.load %arg5[%c58] : memref<64xf32, #tpu.memory_space<smem>>
    %483 = vector.broadcast %482 : f32 to vector<32x128xf32>
    %484 = arith.mulf %481, %483 : vector<32x128xf32>
    %485 = arith.addf %469, %484 : vector<32x128xf32>
    %c59 = arith.constant 59 : index
    %486 = memref.load %arg5[%c59] : memref<64xf32, #tpu.memory_space<smem>>
    %487 = vector.broadcast %486 : f32 to vector<32x128xf32>
    %488 = arith.mulf %481, %487 : vector<32x128xf32>
    %489 = arith.addf %473, %488 : vector<32x128xf32>
    %c30_97 = arith.constant 30 : index
    %490 = memref.load %arg3[%c30_97] : memref<32xf32, #tpu.memory_space<smem>>
    %491 = vector.broadcast %490 : f32 to vector<32x128xf32>
    %492 = arith.mulf %0, %491 : vector<32x128xf32>
    %c30_98 = arith.constant 30 : index
    %493 = memref.load %arg4[%c30_98] : memref<32xf32, #tpu.memory_space<smem>>
    %494 = vector.broadcast %493 : f32 to vector<32x128xf32>
    %495 = arith.addf %492, %494 : vector<32x128xf32>
    %cst_99 = arith.constant 0.000000e+00 : f32
    %496 = vector.broadcast %cst_99 : f32 to vector<32x128xf32>
    %497 = arith.maximumf %495, %496 : vector<32x128xf32>
    %c60 = arith.constant 60 : index
    %498 = memref.load %arg5[%c60] : memref<64xf32, #tpu.memory_space<smem>>
    %499 = vector.broadcast %498 : f32 to vector<32x128xf32>
    %500 = arith.mulf %497, %499 : vector<32x128xf32>
    %501 = arith.addf %485, %500 : vector<32x128xf32>
    %c61 = arith.constant 61 : index
    %502 = memref.load %arg5[%c61] : memref<64xf32, #tpu.memory_space<smem>>
    %503 = vector.broadcast %502 : f32 to vector<32x128xf32>
    %504 = arith.mulf %497, %503 : vector<32x128xf32>
    %505 = arith.addf %489, %504 : vector<32x128xf32>
    %c31_100 = arith.constant 31 : index
    %506 = memref.load %arg3[%c31_100] : memref<32xf32, #tpu.memory_space<smem>>
    %507 = vector.broadcast %506 : f32 to vector<32x128xf32>
    %508 = arith.mulf %0, %507 : vector<32x128xf32>
    %c31_101 = arith.constant 31 : index
    %509 = memref.load %arg4[%c31_101] : memref<32xf32, #tpu.memory_space<smem>>
    %510 = vector.broadcast %509 : f32 to vector<32x128xf32>
    %511 = arith.addf %508, %510 : vector<32x128xf32>
    %cst_102 = arith.constant 0.000000e+00 : f32
    %512 = vector.broadcast %cst_102 : f32 to vector<32x128xf32>
    %513 = arith.maximumf %511, %512 : vector<32x128xf32>
    %c62 = arith.constant 62 : index
    %514 = memref.load %arg5[%c62] : memref<64xf32, #tpu.memory_space<smem>>
    %515 = vector.broadcast %514 : f32 to vector<32x128xf32>
    %516 = arith.mulf %513, %515 : vector<32x128xf32>
    %517 = arith.addf %501, %516 : vector<32x128xf32>
    %c63 = arith.constant 63 : index
    %518 = memref.load %arg5[%c63] : memref<64xf32, #tpu.memory_space<smem>>
    %519 = vector.broadcast %518 : f32 to vector<32x128xf32>
    %520 = arith.mulf %513, %519 : vector<32x128xf32>
    %521 = arith.addf %505, %520 : vector<32x128xf32>
    %522 = arith.mulf %517, %1 : vector<32x128xf32>
    %c0_103 = arith.constant 0 : index
    %c0_104 = arith.constant 0 : index
    %c0_105 = arith.constant 0 : index
    %523 = vector.load %arg7[%c0_103, %c0_104, %c0_105] : memref<2x32x128xf32, #tpu.memory_space<vmem>>, vector<1x32x128xf32>
    %524 = vector.shape_cast %523 : vector<1x32x128xf32> to vector<32x128xf32>
    %525 = vector.shape_cast %522 : vector<32x128xf32> to vector<1x32x128xf32>
    tpu.vector_store %arg7[%c0_103, %c0_104, %c0_105], %525 {strides = array<i32>} : memref<2x32x128xf32, #tpu.memory_space<vmem>>, vector<1x32x128xf32>,
    %526 = arith.mulf %521, %1 : vector<32x128xf32>
    %c1_106 = arith.constant 1 : index
    %c0_107 = arith.constant 0 : index
    %c0_108 = arith.constant 0 : index
    %527 = vector.load %arg7[%c1_106, %c0_107, %c0_108] : memref<2x32x128xf32, #tpu.memory_space<vmem>>, vector<1x32x128xf32>
    %528 = vector.shape_cast %527 : vector<1x32x128xf32> to vector<32x128xf32>
    %529 = vector.shape_cast %526 : vector<32x128xf32> to vector<1x32x128xf32>
    tpu.vector_store %arg7[%c1_106, %c0_107, %c0_108], %529 {strides = array<i32>} : memref<2x32x128xf32, #tpu.memory_space<vmem>>, vector<1x32x128xf32>,
    return
  }
  func.func @transform_0(%arg0: i32) -> (i32, i32) {
    %c0_i32 = arith.constant 0 : i32
    %c0_i32_0 = arith.constant 0 : i32
    return %arg0, %c0_i32 : i32, i32
  }
  func.func @transform_1(%arg0: i32) -> (i32, i32) {
    %c0_i32 = arith.constant 0 : i32
    %c0_i32_0 = arith.constant 0 : i32
    %c0_i32_1 = arith.constant 0 : i32
    return %c0_i32, %c0_i32_0 : i32, i32
  }
  func.func @transform_2(%arg0: i32) -> i32 {
    %c0_i32 = arith.constant 0 : i32
    %c0_i32_0 = arith.constant 0 : i32
    return %c0_i32 : i32
  }
  func.func @transform_3(%arg0: i32) -> i32 {
    %c0_i32 = arith.constant 0 : i32
    %c0_i32_0 = arith.constant 0 : i32
    return %c0_i32 : i32
  }
  func.func @transform_4(%arg0: i32) -> i32 {
    %c0_i32 = arith.constant 0 : i32
    %c0_i32_0 = arith.constant 0 : i32
    return %c0_i32 : i32
  }
  func.func @transform_5(%arg0: i32) -> i32 {
    %c0_i32 = arith.constant 0 : i32
    %c0_i32_0 = arith.constant 0 : i32
    return %c0_i32 : i32
  }
  func.func @transform_6(%arg0: i32) -> (i32, i32, i32) {
    %c0_i32 = arith.constant 0 : i32
    %c0_i32_0 = arith.constant 0 : i32
    %c0_i32_1 = arith.constant 0 : i32
    return %c0_i32, %arg0, %c0_i32_0 : i32, i32, i32
  }
}

</mosaic_0001>

<llo_original>
// kernel: tpu_custom_call.1
$region0: #{tpu_custom_call.1}
  #allocation0 [shape = 'u32[]', space=smem, size = 0x4, offset = 0x4, fixed_abs, tag = 'smem constant byte address 0x4 - core index']
  #allocation1 [shape = 'u32[144,128]{1,0:T(1,128)}', space=vmem, size = 0x12000, scoped, tag = 'internal scratch']
  #allocation15 [shape = 's32[]', space=sflag, size = 0x4, offset = 0, fixed_abs, tag = 'sflag constant byte address 0x0 - dummy sync flag']
  %s0 = inlined_call_operand.hbm [shape: f32[64,128], index: 0, kind: input, shape index: {}]
  %s1 = inlined_call_operand.hbm [shape: f32[32,128], index: 1, kind: input, shape index: {}]
  %s2 = inlined_call_operand.vmem [shape: f32[32], index: 2, kind: input, shape index: {}]
  %s3 = inlined_call_operand.vmem [shape: f32[32], index: 3, kind: input, shape index: {}]
  %s4 = inlined_call_operand.vmem [shape: f32[64], index: 4, kind: input, shape index: {}]
  %s5 = inlined_call_operand.vmem [shape: f32[2], index: 5, kind: input, shape index: {}]
  %s6 = inlined_call_operand.hbm [shape: f32[2,64,128], index: 6, kind: output, shape index: {}]
  %s7 = sld [smem:[#allocation0]]
  $region81: #{tpu_custom_call.1} parent=0
    _
  %s9 = ssub.s32 1, %s7
  %s10 = scalar_select 0, %s9, %s7
  $region1: #{tpu_custom_call.1} parent=0
    #allocation2 [shape = 'u8[32768]{0}', space=vmem, size = 0x8000, scoped, tag = 'input window, operand 0']
    #allocation3 [shape = 's32[2]{0}', space=sflag, size = 0x8, scoped, tag = 'scoped memory for tpu_custom_call.1']
    #allocation4 [shape = 's32[2]{0}', space=sflag, size = 0x8, scoped, tag = 'scoped memory for tpu_custom_call.1']
    #allocation5 [shape = 's32[2]{0}', space=sflag, size = 0x8, scoped, tag = 'scoped memory for tpu_custom_call.1']
    #allocation6 [shape = 'u8[16384]{0}', space=vmem, size = 0x4000, scoped, tag = 'input window, operand 1, single buffered']
    #allocation7 [shape = 's32[1]{0}', space=sflag, size = 0x4, scoped, tag = 'scoped memory for tpu_custom_call.1']
    #allocation8 [shape = 'u8[512]{0}', space=smem, size = 0x200, scoped, tag = 'input window, operand 2, single buffered']
    #allocation9 [shape = 'u8[512]{0}', space=smem, size = 0x200, scoped, tag = 'input window, operand 3, single buffered']
    #allocation10 [shape = 's32[1]{0}', space=sflag, size = 0x4, scoped, tag = 'scoped memory for tpu_custom_call.1']
    #allocation11 [shape = 'u8[512]{0}', space=smem, size = 0x200, scoped, tag = 'input window, operand 4, single buffered']
    #allocation12 [shape = 'u8[512]{0}', space=smem, size = 0x200, scoped, tag = 'input window, operand 5, single buffered']
    #allocation13 [shape = 's32[1]{0}', space=sflag, size = 0x4, scoped, tag = 'scoped memory for tpu_custom_call.1']
    #allocation14 [shape = 'u8[65536]{0}', space=vmem, size = 0x10000, scoped, tag = 'output window, operand 0']
    %11 = vsyncpa [#allocation3], 0
    %s12 = scalar_lea.sflag [#allocation3], 1
    %13 = vsyncpa %s12, 0
    %14 = vsyncpa [#allocation7], 0
    %15 = vsyncpa [#allocation5], 0
    %16 = vsyncpa [#allocation10], 0
    %17 = vsyncpa [#allocation13], 0
    %18 = vsyncpa [#allocation4], 0
    %s19 = scalar_lea.sflag [#allocation4], 1
    %20 = vsyncpa %s19, 0
    loop: start=0, step=1, limit=4
    $region2: #{tpu_custom_call.1} parent=1 // loop_pre_header
      _
    $region3: #{tpu_custom_call.1} parent=1 // loop_header
      %s22 = sphi 0, %s26
      %p23 = scmp.ge.s32.totalorder %s22, 4
      %s32 = sphi 0, %s34
      %s35 = sphi 0, %s32
      %s36 = sphi 0, %s35
      %s52 = sphi 0, %s36
      %s56 = sphi 0, %s56
      %s58 = sphi 0, %s56
      %s59 = sphi 0, %s58
      %s73 = sphi 0, %s59
      %s77 = sphi 0, %s77
      %s79 = sphi 0, %s77
      %s80 = sphi 0, %s79
      %s94 = sphi 0, %s80
      %s98 = sphi 0, %s98
      %s100 = sphi 0, %s98
      %s101 = sphi 0, %s100
      %s115 = sphi 0, %s101
      %s119 = sphi 0, %s119
      %s121 = sphi 0, %s119
      %s122 = sphi 0, %s121
      %s136 = sphi 0, %s122
      %s140 = sphi 0, %s140
      %s142 = sphi 0, %s140
      %s143 = sphi 0, %s142
      %s157 = sphi 0, %s143
      %s163 = sphi 0, %s165
      %s166 = sphi 0, %s163
      %s167 = sphi 0, %s166
      %s183 = sphi 0, %s167
    $region4: #{tpu_custom_call.1} parent=1 // loop_header_branch
      %25 = sbr.rel (%p23) target = $region8
    $region5: #{tpu_custom_call.1} parent=1 // loop_body
      %s27 = ssub.s32 %s22, 1
      %s28 = ssub.s32 %s22, 2
      %s29 = sadd.s32 %s22, 1
      %s30 = ssub.s32 %s22, %s29
      %p31 = scmp.eq.s32.totalorder %s30, 0
      %s33 = sadd.s32 %s32, 1
      %s34 = scalar_select %p31, %s32, %s33
      %p37 = pneg %p31
      %p38 = scmp.eq.s32.totalorder %s22, 1
      %p39 = por %p37, %p38
      %p40 = scmp.ne.s32.totalorder %s32, %s35
      %p41 = scmp.eq.s32.totalorder %s22, 0
      %p42 = por %p40, %p41
      %p43 = scmp.ne.s32.totalorder %s32, %s35
      %p44 = scmp.eq.s32.totalorder %s27, 1
      %p45 = por %p43, %p44
      %p46 = scmp.ne.s32.totalorder %s35, %s36
      %p47 = scmp.eq.s32.totalorder %s27, 0
      %p48 = por %p46, %p47
      %p49 = scmp.ne.s32.totalorder %s35, %s36
      %p50 = scmp.eq.s32.totalorder %s28, 1
      %p51 = por %p49, %p50
      %p53 = scmp.ne.s32.totalorder %s36, %s52
      %p54 = scmp.eq.s32.totalorder %s28, 0
      %p55 = por %p53, %p54
      %s57 = sadd.s32 %s56, 1
      %p60 = scmp.eq.s32.totalorder %s22, 1
      %p61 = scmp.ne.s32.totalorder %s56, %s58
      %p62 = scmp.eq.s32.totalorder %s22, 0
      %p63 = por %p61, %p62
      %p64 = scmp.ne.s32.totalorder %s56, %s58
      %p65 = scmp.eq.s32.totalorder %s27, 1
      %p66 = por %p64, %p65
      %p67 = scmp.ne.s32.totalorder %s58, %s59
      %p68 = scmp.eq.s32.totalorder %s27, 0
      %p69 = por %p67, %p68
      %p70 = scmp.ne.s32.totalorder %s58, %s59
      %p71 = scmp.eq.s32.totalorder %s28, 1
      %p72 = por %p70, %p71
      %p74 = scmp.ne.s32.totalorder %s59, %s73
      %p75 = scmp.eq.s32.totalorder %s28, 0
      %p76 = por %p74, %p75
      %s78 = sadd.s32 %s77, 1
      %p81 = scmp.eq.s32.totalorder %s22, 1
      %p82 = scmp.ne.s32.totalorder %s77, %s79
      %p83 = scmp.eq.s32.totalorder %s22, 0
      %p84 = por %p82, %p83
      %p85 = scmp.ne.s32.totalorder %s77, %s79
      %p86 = scmp.eq.s32.totalorder %s27, 1
      %p87 = por %p85, %p86
      %p88 = scmp.ne.s32.totalorder %s79, %s80
      %p89 = scmp.eq.s32.totalorder %s27, 0
      %p90 = por %p88, %p89
      %p91 = scmp.ne.s32.totalorder %s79, %s80
      %p92 = scmp.eq.s32.totalorder %s28, 1
      %p93 = por %p91, %p92
      %p95 = scmp.ne.s32.totalorder %s80, %s94
      %p96 = scmp.eq.s32.totalorder %s28, 0
      %p97 = por %p95, %p96
      %s99 = sadd.s32 %s98, 1
      %p102 = scmp.eq.s32.totalorder %s22, 1
      %p103 = scmp.ne.s32.totalorder %s98, %s100
      %p104 = scmp.eq.s32.totalorder %s22, 0
      %p105 = por %p103, %p104
      %p106 = scmp.ne.s32.totalorder %s98, %s100
      %p107 = scmp.eq.s32.totalorder %s27, 1
      %p108 = por %p106, %p107
      %p109 = scmp.ne.s32.totalorder %s100, %s101
      %p110 = scmp.eq.s32.totalorder %s27, 0
      %p111 = por %p109, %p110
      %p112 = scmp.ne.s32.totalorder %s100, %s101
      %p113 = scmp.eq.s32.totalorder %s28, 1
      %p114 = por %p112, %p113
      %p116 = scmp.ne.s32.totalorder %s101, %s115
      %p117 = scmp.eq.s32.totalorder %s28, 0
      %p118 = por %p116, %p117
      %s120 = sadd.s32 %s119, 1
      %p123 = scmp.eq.s32.totalorder %s22, 1
      %p124 = scmp.ne.s32.totalorder %s119, %s121
      %p125 = scmp.eq.s32.totalorder %s22, 0
      %p126 = por %p124, %p125
      %p127 = scmp.ne.s32.totalorder %s119, %s121
      %p128 = scmp.eq.s32.totalorder %s27, 1
      %p129 = por %p127, %p128
      %p130 = scmp.ne.s32.totalorder %s121, %s122
      %p131 = scmp.eq.s32.totalorder %s27, 0
      %p132 = por %p130, %p131
      %p133 = scmp.ne.s32.totalorder %s121, %s122
      %p134 = scmp.eq.s32.totalorder %s28, 1
      %p135 = por %p133, %p134
      %p137 = scmp.ne.s32.totalorder %s122, %s136
      %p138 = scmp.eq.s32.totalorder %s28, 0
      %p139 = por %p137, %p138
      %s141 = sadd.s32 %s140, 1
      %p144 = scmp.eq.s32.totalorder %s22, 1
      %p145 = scmp.ne.s32.totalorder %s140, %s142
      %p146 = scmp.eq.s32.totalorder %s22, 0
      %p147 = por %p145, %p146
      %p148 = scmp.ne.s32.totalorder %s140, %s142
      %p149 = scmp.eq.s32.totalorder %s27, 1
      %p150 = por %p148, %p149
      %p151 = scmp.ne.s32.totalorder %s142, %s143
      %p152 = scmp.eq.s32.totalorder %s27, 0
      %p153 = por %p151, %p152
      %p154 = scmp.ne.s32.totalorder %s142, %s143
      %p155 = scmp.eq.s32.totalorder %s28, 1
      %p156 = por %p154, %p155
      %p158 = scmp.ne.s32.totalorder %s143, %s157
      %p159 = scmp.eq.s32.totalorder %s28, 0
      %p160 = por %p158, %p159
      %s161 = ssub.s32 %s22, %s29
      %p162 = scmp.eq.s32.totalorder %s161, 0
      %s164 = sadd.s32 %s163, 1
      %s165 = scalar_select %p162, %s163, %s164
      %p168 = pneg %p162
      %p169 = scmp.eq.s32.totalorder %s22, 1
      %p170 = por %p168, %p169
      %p171 = scmp.ne.s32.totalorder %s163, %s166
      %p172 = scmp.eq.s32.totalorder %s22, 0
      %p173 = por %p171, %p172
      %p174 = scmp.ne.s32.totalorder %s163, %s166
      %p175 = scmp.eq.s32.totalorder %s27, 1
      %p176 = por %p174, %p175
      %p177 = scmp.ne.s32.totalorder %s166, %s167
      %p178 = scmp.eq.s32.totalorder %s27, 0
      %p179 = por %p177, %p178
      %p180 = scmp.ne.s32.totalorder %s166, %s167
      %p181 = scmp.eq.s32.totalorder %s28, 1
      %p182 = por %p180, %p181
      %p184 = scmp.ne.s32.totalorder %s167, %s183
      %p185 = scmp.eq.s32.totalorder %s28, 0
      %p186 = por %p184, %p185
      %p187 = scmp.le.s32.totalorder 1, %s22
      %p188 = scmp.lt.s32.totalorder %s22, 3
      %p189 = pnand %p187, %p188
      %p190 = pneg %p189
      // Predicated region
      $region9: #{tpu_custom_call.1} parent=5 // pred_check
        _
      $region10: #{tpu_custom_call.1} parent=5 // pred_check_branch
        %192 = sbr.rel (%p189) target = $region12
      $region11: #{tpu_custom_call.1} parent=5 // pred_region
        %s193 = ssub.s32 %s22, 1
        // Predicated region
        $region13: #{tpu_custom_call.1} parent=11 // pred_check
          %p194 = pneg %p69
        $region14: #{tpu_custom_call.1} parent=11 // pred_check_branch
          %196 = sbr.rel (%p194) target = $region16
        $region15: #{tpu_custom_call.1} parent=11 // pred_region
          %s198 = ssub.s32 512, 512
          %199 = vsyncadd [#allocation7], %s198
          %s200 = sshll.u32 [#allocation6], 4
          %s201 = int_to_ptr.vmem [resolvable:$true] %s200
          %206 = dma.hbm_to_vmem [thread:$0]  %s1, 512, %s201, [#allocation7], 128, 128, 8
        $region16: #{tpu_custom_call.1} parent=11 // pred_fallthru
          _
        // Predicated region
        $region17: #{tpu_custom_call.1} parent=11 // pred_check
          %p207 = pneg %p90
        $region18: #{tpu_custom_call.1} parent=11 // pred_check_branch
          %209 = sbr.rel (%p207) target = $region20
        $region19: #{tpu_custom_call.1} parent=11 // pred_region
          %s211 = ssub.s32 16, 16
          %212 = vsyncadd [#allocation5], %s211
          %s214 = sshll.u32 %s2, 4
          %s215 = int_to_ptr.vmem [resolvable:$true] %s214
          %217 = dma.vmem_to_smem %s215, 16, [#allocation8], [#allocation5]
        $region20: #{tpu_custom_call.1} parent=11 // pred_fallthru
          _
        // Predicated region
        $region21: #{tpu_custom_call.1} parent=11 // pred_check
          %p218 = pneg %p111
        $region22: #{tpu_custom_call.1} parent=11 // pred_check_branch
          %220 = sbr.rel (%p218) target = $region24
        $region23: #{tpu_custom_call.1} parent=11 // pred_region
          %s222 = ssub.s32 16, 16
          %223 = vsyncadd [#allocation10], %s222
          %s225 = sshll.u32 %s3, 4
          %s226 = int_to_ptr.vmem [resolvable:$true] %s225
          %228 = dma.vmem_to_smem %s226, 16, [#allocation9], [#allocation10]
        $region24: #{tpu_custom_call.1} parent=11 // pred_fallthru
          _
        // Predicated region
        $region25: #{tpu_custom_call.1} parent=11 // pred_check
          %p229 = pneg %p132
        $region26: #{tpu_custom_call.1} parent=11 // pred_check_branch
          %231 = sbr.rel (%p229) target = $region28
        $region27: #{tpu_custom_call.1} parent=11 // pred_region
          %s233 = ssub.s32 16, 16
          %234 = vsyncadd [#allocation10], %s233
          %s236 = sshll.u32 %s4, 4
          %s237 = int_to_ptr.vmem [resolvable:$true] %s236
          %239 = dma.vmem_to_smem %s237, 16, [#allocation11], [#allocation10]
        $region28: #{tpu_custom_call.1} parent=11 // pred_fallthru
          _
        // Predicated region
        $region29: #{tpu_custom_call.1} parent=11 // pred_check
          %p240 = pneg %p153
        $region30: #{tpu_custom_call.1} parent=11 // pred_check_branch
          %242 = sbr.rel (%p240) target = $region32
        $region31: #{tpu_custom_call.1} parent=11 // pred_region
          %s244 = ssub.s32 16, 16
          %245 = vsyncadd [#allocation13], %s244
          %s247 = sshll.u32 %s5, 4
          %s248 = int_to_ptr.vmem [resolvable:$true] %s247
          %250 = dma.vmem_to_smem %s248, 16, [#allocation12], [#allocation13]
        $region32: #{tpu_custom_call.1} parent=11 // pred_fallthru
          _
      $region12: #{tpu_custom_call.1} parent=5 // pred_fallthru
        _
      %p251 = scmp.lt.s32.totalorder %s22, 2
      // Predicated region
      $region33: #{tpu_custom_call.1} parent=5 // pred_check
        %p252 = pneg %p251
      $region34: #{tpu_custom_call.1} parent=5 // pred_check_branch
        %254 = sbr.rel (%p252) target = $region36
      $region35: #{tpu_custom_call.1} parent=5 // pred_region
        // Predicated region
        $region37: #{tpu_custom_call.1} parent=35 // pred_check
          %p255 = pneg %p42
        $region38: #{tpu_custom_call.1} parent=35 // pred_check_branch
          %257 = sbr.rel (%p255) target = $region40
        $region39: #{tpu_custom_call.1} parent=35 // pred_region
          %s258 = sand.u32 %s32, 1
          %s259 = scalar_lea.sflag [#allocation3], %s258
          %s260 = sand.u32 %s32, 1
          %s261 = smul.addr %s260, 32
          %s262 = scalar_lea.vmem [#allocation2], %s261
          %s263 = smul.u32 4, %s22
          %s265 = ssub.s32 512, 512
          %266 = vsyncadd %s259, %s265
          %s267 = smul.addr %s263, 128
          %s268 = scalar_lea.hbm %s0, %s267
          %s269 = sshll.u32 %s262, 4
          %s270 = int_to_ptr.vmem [resolvable:$true] %s269
          %275 = dma.hbm_to_vmem [thread:$0]  %s268, 512, %s270, %s259, 128, 128, 8
        $region40: #{tpu_custom_call.1} parent=35 // pred_fallthru
          _
      $region36: #{tpu_custom_call.1} parent=5 // pred_fallthru
        _
      %p276 = scmp.le.s32.totalorder 1, %s22
      %p277 = scmp.lt.s32.totalorder %s22, 3
      %p278 = pnand %p276, %p277
      %p279 = pneg %p278
      // Predicated region
      $region41: #{tpu_custom_call.1} parent=5 // pred_check
        _
      $region42: #{tpu_custom_call.1} parent=5 // pred_check_branch
        %281 = sbr.rel (%p278) target = $region44
      $region43: #{tpu_custom_call.1} parent=5 // pred_region
        %s282 = ssub.s32 %s22, 1
        %s283 = sand.u32 %s35, 1
        %s284 = scalar_lea.sflag [#allocation3], %s283
        %s285 = sand.u32 %s35, 1
        %s286 = smul.addr %s285, 32
        %s287 = scalar_lea.vmem [#allocation2], %s286
        // Predicated region
        $region45: #{tpu_custom_call.1} parent=43 // pred_check
          %p288 = pneg %p48
        $region46: #{tpu_custom_call.1} parent=43 // pred_check_branch
          %290 = sbr.rel (%p288) target = $region48
        $region47: #{tpu_custom_call.1} parent=43 // pred_region
          %291 = dma.done %s284, 512
        $region48: #{tpu_custom_call.1} parent=43 // pred_fallthru
          _
        // Predicated region
        $region49: #{tpu_custom_call.1} parent=43 // pred_check
          %p292 = pneg %p69
        $region50: #{tpu_custom_call.1} parent=43 // pred_check_branch
          %294 = sbr.rel (%p292) target = $region52
        $region51: #{tpu_custom_call.1} parent=43 // pred_region
          %295 = dma.done [#allocation7], 512
        $region52: #{tpu_custom_call.1} parent=43 // pred_fallthru
          _
        // Predicated region
        $region53: #{tpu_custom_call.1} parent=43 // pred_check
          %p296 = pneg %p90
        $region54: #{tpu_custom_call.1} parent=43 // pred_check_branch
          %298 = sbr.rel (%p296) target = $region56
        $region55: #{tpu_custom_call.1} parent=43 // pred_region
          %299 = dma.done [#allocation5], 16
        $region56: #{tpu_custom_call.1} parent=43 // pred_fallthru
          _
        // Predicated region
        $region57: #{tpu_custom_call.1} parent=43 // pred_check
          %p300 = pneg %p111
        $region58: #{tpu_custom_call.1} parent=43 // pred_check_branch
          %302 = sbr.rel (%p300) target = $region60
        $region59: #{tpu_custom_call.1} parent=43 // pred_region
          %303 = dma.done [#allocation10], 16
        $region60: #{tpu_custom_call.1} parent=43 // pred_fallthru
          _
        // Predicated region
        $region61: #{tpu_custom_call.1} parent=43 // pred_check
          %p304 = pneg %p132
        $region62: #{tpu_custom_call.1} parent=43 // pred_check_branch
          %306 = sbr.rel (%p304) target = $region64
        $region63: #{tpu_custom_call.1} parent=43 // pred_region
          %307 = dma.done [#allocation10], 16
        $region64: #{tpu_custom_call.1} parent=43 // pred_fallthru
          _
        // Predicated region
        $region65: #{tpu_custom_call.1} parent=43 // pred_check
          %p308 = pneg %p153
        $region66: #{tpu_custom_call.1} parent=43 // pred_check_branch
          %310 = sbr.rel (%p308) target = $region68
        $region67: #{tpu_custom_call.1} parent=43 // pred_region
          %311 = dma.done [#allocation13], 16
        $region68: #{tpu_custom_call.1} parent=43 // pred_fallthru
          _
        %312 = sfence
        %s313 = sand.u32 %s35, 1
        %s314 = scalar_lea.sflag [#allocation3], %s313
        %s315 = sand.u32 %s35, 1
        %s316 = smul.addr %s315, 32
        %s317 = scalar_lea.vmem [#allocation2], %s316
        %p318 = pneg %p48
        %p319 = pneg %p45
        %p320 = pneg %p69
        %p321 = pneg %p66
        %p322 = pneg %p90
        %p323 = pneg %p87
        %p324 = pneg %p111
        %p325 = pneg %p108
        %p326 = pneg %p132
        %p327 = pneg %p129
        %p328 = pneg %p153
        %p329 = pneg %p150
        %p330 = pneg %p179
        %p331 = pneg %p176
        %s332 = sand.u32 %s166, 1
        %s333 = scalar_lea.sflag [#allocation4], %s332
        %s334 = sand.u32 %s166, 1
        %s335 = smul.addr %s334, 64
        %s336 = scalar_lea.vmem [#allocation14], %s335
        %s337 = smul.u32 4, %s27
        %s338 = smul.u32 4, %s27
        %v339 = vld [vmem:[%s287] sm:$0xff]
        %v340 = vld [vmem:[%s287 + $0x8] sm:$0xff]
        %v341 = vld [vmem:[%s287 + $0x10] sm:$0xff]
        %v342 = vld [vmem:[%s287 + $0x18] sm:$0xff]
        %v343 = vld [vmem:[#allocation6] sm:$0xff]
        %v344 = vld [vmem:[#allocation6 + $0x8] sm:$0xff]
        %v345 = vld [vmem:[#allocation6 + $0x10] sm:$0xff]
        %v346 = vld [vmem:[#allocation6 + $0x18] sm:$0xff]
        %s347 = sld [smem:[#allocation12]]
        %v348 = vstv %s347
        %v349 = vadd.f32 %v348, 0.0
        %s350 = sld [smem:[#allocation12 + $0x1]]
        %v351 = vstv %s350
        %v352 = vadd.f32 %v351, 0.0
        %s353 = sld [smem:[#allocation8]]
        %v354 = vstv %s353
        %v355 = vmul.f32 %v339, %v354
        %v356 = vmul.f32 %v340, %v354
        %v357 = vmul.f32 %v341, %v354
        %v358 = vmul.f32 %v342, %v354
        %s359 = sld [smem:[#allocation9]]
        %v360 = vstv %s359
        %v361 = vadd.f32 %v355, %v360
        %v362 = vadd.f32 %v356, %v360
        %v363 = vadd.f32 %v357, %v360
        %v364 = vadd.f32 %v358, %v360
        %v365 = vmax.f32 %v361, 0.0
        %v366 = vmax.f32 %v362, 0.0
        %v367 = vmax.f32 %v363, 0.0
        %v368 = vmax.f32 %v364, 0.0
        %s369 = sld [smem:[#allocation11]]
        %v370 = vstv %s369
        %v371 = vmul.f32 %v365, %v370
        %v372 = vmul.f32 %v366, %v370
        %v373 = vmul.f32 %v367, %v370
        %v374 = vmul.f32 %v368, %v370
        %v375 = vadd.f32 %v349, %v371
        %v376 = vadd.f32 %v349, %v372
        %v377 = vadd.f32 %v349, %v373
        %v378 = vadd.f32 %v349, %v374
        %s379 = sld [smem:[#allocation11 + $0x1]]
        %v380 = vstv %s379
        %v381 = vmul.f32 %v365, %v380
        %v382 = vmul.f32 %v366, %v380
        %v383 = vmul.f32 %v367, %v380
        %v384 = vmul.f32 %v368, %v380
        %v385 = vadd.f32 %v352, %v381
        %v386 = vadd.f32 %v352, %v382
        %v387 = vadd.f32 %v352, %v383
        %v388 = vadd.f32 %v352, %v384
        %s389 = sld [smem:[#allocation8 + $0x1]]
        %v390 = vstv %s389
        %v391 = vmul.f32 %v339, %v390
        %v392 = vmul.f32 %v340, %v390
        %v393 = vmul.f32 %v341, %v390
        %v394 = vmul.f32 %v342, %v390
        %s395 = sld [smem:[#allocation9 + $0x1]]
        %v396 = vstv %s395
        %v397 = vadd.f32 %v391, %v396
        %v398 = vadd.f32 %v392, %v396
        %v399 = vadd.f32 %v393, %v396
        %v400 = vadd.f32 %v394, %v396
        %v401 = vmax.f32 %v397, 0.0
        %v402 = vmax.f32 %v398, 0.0
        %v403 = vmax.f32 %v399, 0.0
        %v404 = vmax.f32 %v400, 0.0
        %s405 = sld [smem:[#allocation11 + $0x2]]
        %v406 = vstv %s405
        %v407 = vmul.f32 %v401, %v406
        %v408 = vmul.f32 %v402, %v406
        %v409 = vmul.f32 %v403, %v406
        %v410 = vmul.f32 %v404, %v406
        %v411 = vadd.f32 %v375, %v407
        %v412 = vadd.f32 %v376, %v408
        %v413 = vadd.f32 %v377, %v409
        %v414 = vadd.f32 %v378, %v410
        %s415 = sld [smem:[#allocation11 + $0x3]]
        %v416 = vstv %s415
        %v417 = vmul.f32 %v401, %v416
        %v418 = vmul.f32 %v402, %v416
        %v419 = vmul.f32 %v403, %v416
        %v420 = vmul.f32 %v404, %v416
        %v421 = vadd.f32 %v385, %v417
        %v422 = vadd.f32 %v386, %v418
        %v423 = vadd.f32 %v387, %v419
        %v424 = vadd.f32 %v388, %v420
        %s425 = sld [smem:[#allocation8 + $0x2]]
        %v426 = vstv %s425
        %v427 = vmul.f32 %v339, %v426
        %v428 = vmul.f32 %v340, %v426
        %v429 = vmul.f32 %v341, %v426
        %v430 = vmul.f32 %v342, %v426
        %s431 = sld [smem:[#allocation9 + $0x2]]
        %v432 = vstv %s431
        %v433 = vadd.f32 %v427, %v432
        %v434 = vadd.f32 %v428, %v432
        %v435 = vadd.f32 %v429, %v432
        %v436 = vadd.f32 %v430, %v432
        %v437 = vmax.f32 %v433, 0.0
        %v438 = vmax.f32 %v434, 0.0
        %v439 = vmax.f32 %v435, 0.0
        %v440 = vmax.f32 %v436, 0.0
        %s441 = sld [smem:[#allocation11 + $0x4]]
        %v442 = vstv %s441
        %v443 = vmul.f32 %v437, %v442
        %v444 = vmul.f32 %v438, %v442
        %v445 = vmul.f32 %v439, %v442
        %v446 = vmul.f32 %v440, %v442
        %v447 = vadd.f32 %v411, %v443
        %v448 = vadd.f32 %v412, %v444
        %v449 = vadd.f32 %v413, %v445
        %v450 = vadd.f32 %v414, %v446
        %s451 = sld [smem:[#allocation11 + $0x5]]
        %v452 = vstv %s451
        %v453 = vmul.f32 %v437, %v452
        %v454 = vmul.f32 %v438, %v452
        %v455 = vmul.f32 %v439, %v452
        %v456 = vmul.f32 %v440, %v452
        %v457 = vadd.f32 %v421, %v453
        %v458 = vadd.f32 %v422, %v454
        %v459 = vadd.f32 %v423, %v455
        %v460 = vadd.f32 %v424, %v456
        %s461 = sld [smem:[#allocation8 + $0x3]]
        %v462 = vstv %s461
        %v463 = vmul.f32 %v339, %v462
        %v464 = vmul.f32 %v340, %v462
        %v465 = vmul.f32 %v341, %v462
        %v466 = vmul.f32 %v342, %v462
        %s467 = sld [smem:[#allocation9 + $0x3]]
        %v468 = vstv %s467
        %v469 = vadd.f32 %v463, %v468
        %v470 = vadd.f32 %v464, %v468
        %v471 = vadd.f32 %v465, %v468
        %v472 = vadd.f32 %v466, %v468
        %v473 = vmax.f32 %v469, 0.0
        %v474 = vmax.f32 %v470, 0.0
        %v475 = vmax.f32 %v471, 0.0
        %v476 = vmax.f32 %v472, 0.0
        %s477 = sld [smem:[#allocation11 + $0x6]]
        %v478 = vstv %s477
        %v479 = vmul.f32 %v473, %v478
        %v480 = vmul.f32 %v474, %v478
        %v481 = vmul.f32 %v475, %v478
        %v482 = vmul.f32 %v476, %v478
        %v483 = vadd.f32 %v447, %v479
        %v484 = vadd.f32 %v448, %v480
        %v485 = vadd.f32 %v449, %v481
        %v486 = vadd.f32 %v450, %v482
        %s487 = sld [smem:[#allocation11 + $0x7]]
        %v488 = vstv %s487
        %v489 = vmul.f32 %v473, %v488
        %v490 = vmul.f32 %v474, %v488
        %v491 = vmul.f32 %v475, %v488
        %v492 = vmul.f32 %v476, %v488
        %v493 = vadd.f32 %v457, %v489
        %v494 = vadd.f32 %v458, %v490
        %v495 = vadd.f32 %v459, %v491
        %v496 = vadd.f32 %v460, %v492
        %s497 = sld [smem:[#allocation8 + $0x4]]
        %v498 = vstv %s497
        %v499 = vmul.f32 %v339, %v498
        %v500 = vmul.f32 %v340, %v498
        %v501 = vmul.f32 %v341, %v498
        %v502 = vmul.f32 %v342, %v498
        %s503 = sld [smem:[#allocation9 + $0x4]]
        %v504 = vstv %s503
        %v505 = vadd.f32 %v499, %v504
        %v506 = vadd.f32 %v500, %v504
        %v507 = vadd.f32 %v501, %v504
        %v508 = vadd.f32 %v502, %v504
        %v509 = vmax.f32 %v505, 0.0
        %v510 = vmax.f32 %v506, 0.0
        %v511 = vmax.f32 %v507, 0.0
        %v512 = vmax.f32 %v508, 0.0
        %s513 = sld [smem:[#allocation11 + $0x8]]
        %v514 = vstv %s513
        %v515 = vmul.f32 %v509, %v514
        %v516 = vmul.f32 %v510, %v514
        %v517 = vmul.f32 %v511, %v514
        %v518 = vmul.f32 %v512, %v514
        %v519 = vadd.f32 %v483, %v515
        %v520 = vadd.f32 %v484, %v516
        %v521 = vadd.f32 %v485, %v517
        %v522 = vadd.f32 %v486, %v518
        %s523 = sld [smem:[#allocation11 + $0x9]]
        %v524 = vstv %s523
        %v525 = vmul.f32 %v509, %v524
        %v526 = vmul.f32 %v510, %v524
        %v527 = vmul.f32 %v511, %v524
        %v528 = vmul.f32 %v512, %v524
        %v529 = vadd.f32 %v493, %v525
        %v530 = vadd.f32 %v494, %v526
        %v531 = vadd.f32 %v495, %v527
        %v532 = vadd.f32 %v496, %v528
        %s533 = sld [smem:[#allocation8 + $0x5]]
        %v534 = vstv %s533
        %v535 = vmul.f32 %v339, %v534
        %v536 = vmul.f32 %v340, %v534
        %v537 = vmul.f32 %v341, %v534
        %v538 = vmul.f32 %v342, %v534
        %s539 = sld [smem:[#allocation9 + $0x5]]
        %v540 = vstv %s539
        %v541 = vadd.f32 %v535, %v540
        %v542 = vadd.f32 %v536, %v540
        %v543 = vadd.f32 %v537, %v540
        %v544 = vadd.f32 %v538, %v540
        %v545 = vmax.f32 %v541, 0.0
        %v546 = vmax.f32 %v542, 0.0
        %v547 = vmax.f32 %v543, 0.0
        %v548 = vmax.f32 %v544, 0.0
        %s549 = sld [smem:[#allocation11 + $0xa]]
        %v550 = vstv %s549
        %v551 = vmul.f32 %v545, %v550
        %v552 = vmul.f32 %v546, %v550
        %v553 = vmul.f32 %v547, %v550
        %v554 = vmul.f32 %v548, %v550
        %v555 = vadd.f32 %v519, %v551
        %v556 = vadd.f32 %v520, %v552
        %v557 = vadd.f32 %v521, %v553
        %v558 = vadd.f32 %v522, %v554
        %s559 = sld [smem:[#allocation11 + $0xb]]
        %v560 = vstv %s559
        %v561 = vmul.f32 %v545, %v560
        %v562 = vmul.f32 %v546, %v560
        %v563 = vmul.f32 %v547, %v560
        %v564 = vmul.f32 %v548, %v560
        %v565 = vadd.f32 %v529, %v561
        %v566 = vadd.f32 %v530, %v562
        %v567 = vadd.f32 %v531, %v563
        %v568 = vadd.f32 %v532, %v564
        %s569 = sld [smem:[#allocation8 + $0x6]]
        %v570 = vstv %s569
        %v571 = vmul.f32 %v339, %v570
        %v572 = vmul.f32 %v340, %v570
        %v573 = vmul.f32 %v341, %v570
        %v574 = vmul.f32 %v342, %v570
        %s575 = sld [smem:[#allocation9 + $0x6]]
        %v576 = vstv %s575
        %v577 = vadd.f32 %v571, %v576
        %v578 = vadd.f32 %v572, %v576
        %v579 = vadd.f32 %v573, %v576
        %v580 = vadd.f32 %v574, %v576
        %v581 = vmax.f32 %v577, 0.0
        %v582 = vmax.f32 %v578, 0.0
        %v583 = vmax.f32 %v579, 0.0
        %v584 = vmax.f32 %v580, 0.0
        %s585 = sld [smem:[#allocation11 + $0xc]]
        %v586 = vstv %s585
        %v587 = vmul.f32 %v581, %v586
        %v588 = vmul.f32 %v582, %v586
        %v589 = vmul.f32 %v583, %v586
        %v590 = vmul.f32 %v584, %v586
        %v591 = vadd.f32 %v555, %v587
        %v592 = vadd.f32 %v556, %v588
        %v593 = vadd.f32 %v557, %v589
        %v594 = vadd.f32 %v558, %v590
        %s595 = sld [smem:[#allocation11 + $0xd]]
        %v596 = vstv %s595
        %v597 = vmul.f32 %v581, %v596
        %v598 = vmul.f32 %v582, %v596
        %v599 = vmul.f32 %v583, %v596
        %v600 = vmul.f32 %v584, %v596
        %v601 = vadd.f32 %v565, %v597
        %v602 = vadd.f32 %v566, %v598
        %v603 = vadd.f32 %v567, %v599
        %v604 = vadd.f32 %v568, %v600
        %s605 = sld [smem:[#allocation8 + $0x7]]
        %v606 = vstv %s605
        %v607 = vmul.f32 %v339, %v606
        %v608 = vmul.f32 %v340, %v606
        %v609 = vmul.f32 %v341, %v606
        %v610 = vmul.f32 %v342, %v606
        %s611 = sld [smem:[#allocation9 + $0x7]]
        %v612 = vstv %s611
        %v613 = vadd.f32 %v607, %v612
        %v614 = vadd.f32 %v608, %v612
        %v615 = vadd.f32 %v609, %v612
        %v616 = vadd.f32 %v610, %v612
        %v617 = vmax.f32 %v613, 0.0
        %v618 = vmax.f32 %v614, 0.0
        %v619 = vmax.f32 %v615, 0.0
        %v620 = vmax.f32 %v616, 0.0
        %s621 = sld [smem:[#allocation11 + $0xe]]
        %v622 = vstv %s621
        %v623 = vmul.f32 %v617, %v622
        %v624 = vmul.f32 %v618, %v622
        %v625 = vmul.f32 %v619, %v622
        %v626 = vmul.f32 %v620, %v622
        %v627 = vadd.f32 %v591, %v623
        %v628 = vadd.f32 %v592, %v624
        %v629 = vadd.f32 %v593, %v625
        %v630 = vadd.f32 %v594, %v626
        %s631 = sld [smem:[#allocation11 + $0xf]]
        %v632 = vstv %s631
        %v633 = vmul.f32 %v617, %v632
        %v634 = vmul.f32 %v618, %v632
        %v635 = vmul.f32 %v619, %v632
        %v636 = vmul.f32 %v620, %v632
        %v637 = vadd.f32 %v601, %v633
        %v638 = vadd.f32 %v602, %v634
        %v639 = vadd.f32 %v603, %v635
        %v640 = vadd.f32 %v604, %v636
        %s641 = sld [smem:[#allocation8 + $0x8]]
        %v642 = vstv %s641
        %v643 = vmul.f32 %v339, %v642
        %v644 = vmul.f32 %v340, %v642
        %v645 = vmul.f32 %v341, %v642
        %v646 = vmul.f32 %v342, %v642
        %s647 = sld [smem:[#allocation9 + $0x8]]
        %v648 = vstv %s647
        %v649 = vadd.f32 %v643, %v648
        %v650 = vadd.f32 %v644, %v648
        %v651 = vadd.f32 %v645, %v648
        %v652 = vadd.f32 %v646, %v648
        %v653 = vmax.f32 %v649, 0.0
        %v654 = vmax.f32 %v650, 0.0
        %v655 = vmax.f32 %v651, 0.0
        %v656 = vmax.f32 %v652, 0.0
        %s657 = sld [smem:[#allocation11 + $0x10]]
        %v658 = vstv %s657
        %v659 = vmul.f32 %v653, %v658
        %v660 = vmul.f32 %v654, %v658
        %v661 = vmul.f32 %v655, %v658
        %v662 = vmul.f32 %v656, %v658
        %v663 = vadd.f32 %v627, %v659
        %v664 = vadd.f32 %v628, %v660
        %v665 = vadd.f32 %v629, %v661
        %v666 = vadd.f32 %v630, %v662
        %s667 = sld [smem:[#allocation11 + $0x11]]
        %v668 = vstv %s667
        %v669 = vmul.f32 %v653, %v668
        %v670 = vmul.f32 %v654, %v668
        %v671 = vmul.f32 %v655, %v668
        %v672 = vmul.f32 %v656, %v668
        %v673 = vadd.f32 %v637, %v669
        %v674 = vadd.f32 %v638, %v670
        %v675 = vadd.f32 %v639, %v671
        %v676 = vadd.f32 %v640, %v672
        %s677 = sld [smem:[#allocation8 + $0x9]]
        %v678 = vstv %s677
        %v679 = vmul.f32 %v339, %v678
        %v680 = vmul.f32 %v340, %v678
        %v681 = vmul.f32 %v341, %v678
        %v682 = vmul.f32 %v342, %v678
        %s683 = sld [smem:[#allocation9 + $0x9]]
        %v684 = vstv %s683
        %v685 = vadd.f32 %v679, %v684
        %v686 = vadd.f32 %v680, %v684
        %v687 = vadd.f32 %v681, %v684
        %v688 = vadd.f32 %v682, %v684
        %v689 = vmax.f32 %v685, 0.0
        %v690 = vmax.f32 %v686, 0.0
        %v691 = vmax.f32 %v687, 0.0
        %v692 = vmax.f32 %v688, 0.0
        %s693 = sld [smem:[#allocation11 + $0x12]]
        %v694 = vstv %s693
        %v695 = vmul.f32 %v689, %v694
        %v696 = vmul.f32 %v690, %v694
        %v697 = vmul.f32 %v691, %v694
        %v698 = vmul.f32 %v692, %v694
        %v699 = vadd.f32 %v663, %v695
        %v700 = vadd.f32 %v664, %v696
        %v701 = vadd.f32 %v665, %v697
        %v702 = vadd.f32 %v666, %v698
        %s703 = sld [smem:[#allocation11 + $0x13]]
        %v704 = vstv %s703
        %v705 = vmul.f32 %v689, %v704
        %v706 = vmul.f32 %v690, %v704
        %v707 = vmul.f32 %v691, %v704
        %v708 = vmul.f32 %v692, %v704
        %v709 = vadd.f32 %v673, %v705
        %v710 = vadd.f32 %v674, %v706
        %v711 = vadd.f32 %v675, %v707
        %v712 = vadd.f32 %v676, %v708
        %s713 = sld [smem:[#allocation8 + $0xa]]
        %v714 = vstv %s713
        %v715 = vmul.f32 %v339, %v714
        %v716 = vmul.f32 %v340, %v714
        %v717 = vmul.f32 %v341, %v714
        %v718 = vmul.f32 %v342, %v714
        %s719 = sld [smem:[#allocation9 + $0xa]]
        %v720 = vstv %s719
        %v721 = vadd.f32 %v715, %v720
        %v722 = vadd.f32 %v716, %v720
        %v723 = vadd.f32 %v717, %v720
        %v724 = vadd.f32 %v718, %v720
        %v725 = vmax.f32 %v721, 0.0
        %v726 = vmax.f32 %v722, 0.0
        %v727 = vmax.f32 %v723, 0.0
        %v728 = vmax.f32 %v724, 0.0
        %s729 = sld [smem:[#allocation11 + $0x14]]
        %v730 = vstv %s729
        %v731 = vmul.f32 %v725, %v730
        %v732 = vmul.f32 %v726, %v730
        %v733 = vmul.f32 %v727, %v730
        %v734 = vmul.f32 %v728, %v730
        %v735 = vadd.f32 %v699, %v731
        %v736 = vadd.f32 %v700, %v732
        %v737 = vadd.f32 %v701, %v733
        %v738 = vadd.f32 %v702, %v734
        %s739 = sld [smem:[#allocation11 + $0x15]]
        %v740 = vstv %s739
        %v741 = vmul.f32 %v725, %v740
        %v742 = vmul.f32 %v726, %v740
        %v743 = vmul.f32 %v727, %v740
        %v744 = vmul.f32 %v728, %v740
        %v745 = vadd.f32 %v709, %v741
        %v746 = vadd.f32 %v710, %v742
        %v747 = vadd.f32 %v711, %v743
        %v748 = vadd.f32 %v712, %v744
        %s749 = sld [smem:[#allocation8 + $0xb]]
        %v750 = vstv %s749
        %v751 = vmul.f32 %v339, %v750
        %v752 = vmul.f32 %v340, %v750
        %v753 = vmul.f32 %v341, %v750
        %v754 = vmul.f32 %v342, %v750
        %s755 = sld [smem:[#allocation9 + $0xb]]
        %v756 = vstv %s755
        %v757 = vadd.f32 %v751, %v756
        %v758 = vadd.f32 %v752, %v756
        %v759 = vadd.f32 %v753, %v756
        %v760 = vadd.f32 %v754, %v756
        %v761 = vmax.f32 %v757, 0.0
        %v762 = vmax.f32 %v758, 0.0
        %v763 = vmax.f32 %v759, 0.0
        %v764 = vmax.f32 %v760, 0.0
        %s765 = sld [smem:[#allocation11 + $0x16]]
        %v766 = vstv %s765
        %v767 = vmul.f32 %v761, %v766
        %v768 = vmul.f32 %v762, %v766
        %v769 = vmul.f32 %v763, %v766
        %v770 = vmul.f32 %v764, %v766
        %v771 = vadd.f32 %v735, %v767
        %v772 = vadd.f32 %v736, %v768
        %v773 = vadd.f32 %v737, %v769
        %v774 = vadd.f32 %v738, %v770
        %s775 = sld [smem:[#allocation11 + $0x17]]
        %v776 = vstv %s775
        %v777 = vmul.f32 %v761, %v776
        %v778 = vmul.f32 %v762, %v776
        %v779 = vmul.f32 %v763, %v776
        %v780 = vmul.f32 %v764, %v776
        %v781 = vadd.f32 %v745, %v777
        %v782 = vadd.f32 %v746, %v778
        %v783 = vadd.f32 %v747, %v779
        %v784 = vadd.f32 %v748, %v780
        %s785 = sld [smem:[#allocation8 + $0xc]]
        %v786 = vstv %s785
        %v787 = vmul.f32 %v339, %v786
        %v788 = vmul.f32 %v340, %v786
        %v789 = vmul.f32 %v341, %v786
        %v790 = vmul.f32 %v342, %v786
        %s791 = sld [smem:[#allocation9 + $0xc]]
        %v792 = vstv %s791
        %v793 = vadd.f32 %v787, %v792
        %v794 = vadd.f32 %v788, %v792
        %v795 = vadd.f32 %v789, %v792
        %v796 = vadd.f32 %v790, %v792
        %v797 = vmax.f32 %v793, 0.0
        %v798 = vmax.f32 %v794, 0.0
        %v799 = vmax.f32 %v795, 0.0
        %v800 = vmax.f32 %v796, 0.0
        %s801 = sld [smem:[#allocation11 + $0x18]]
        %v802 = vstv %s801
        %v803 = vmul.f32 %v797, %v802
        %v804 = vmul.f32 %v798, %v802
        %v805 = vmul.f32 %v799, %v802
        %v806 = vmul.f32 %v800, %v802
        %v807 = vadd.f32 %v771, %v803
        %v808 = vadd.f32 %v772, %v804
        %v809 = vadd.f32 %v773, %v805
        %v810 = vadd.f32 %v774, %v806
        %s811 = sld [smem:[#allocation11 + $0x19]]
        %v812 = vstv %s811
        %v813 = vmul.f32 %v797, %v812
        %v814 = vmul.f32 %v798, %v812
        %v815 = vmul.f32 %v799, %v812
        %v816 = vmul.f32 %v800, %v812
        %v817 = vadd.f32 %v781, %v813
        %v818 = vadd.f32 %v782, %v814
        %v819 = vadd.f32 %v783, %v815
        %v820 = vadd.f32 %v784, %v816
        %s821 = sld [smem:[#allocation8 + $0xd]]
        %v822 = vstv %s821
        %v823 = vmul.f32 %v339, %v822
        %v824 = vmul.f32 %v340, %v822
        %v825 = vmul.f32 %v341, %v822
        %v826 = vmul.f32 %v342, %v822
        %s827 = sld [smem:[#allocation9 + $0xd]]
        %v828 = vstv %s827
        %v829 = vadd.f32 %v823, %v828
        %v830 = vadd.f32 %v824, %v828
        %v831 = vadd.f32 %v825, %v828
        %v832 = vadd.f32 %v826, %v828
        %v833 = vmax.f32 %v829, 0.0
        %v834 = vmax.f32 %v830, 0.0
        %v835 = vmax.f32 %v831, 0.0
        %v836 = vmax.f32 %v832, 0.0
        %s837 = sld [smem:[#allocation11 + $0x1a]]
        %v838 = vstv %s837
        %v839 = vmul.f32 %v833, %v838
        %v840 = vmul.f32 %v834, %v838
        %v841 = vmul.f32 %v835, %v838
        %v842 = vmul.f32 %v836, %v838
        %v843 = vadd.f32 %v807, %v839
        %v844 = vadd.f32 %v808, %v840
        %v845 = vadd.f32 %v809, %v841
        %v846 = vadd.f32 %v810, %v842
        %s847 = sld [smem:[#allocation11 + $0x1b]]
        %v848 = vstv %s847
        %v849 = vmul.f32 %v833, %v848
        %v850 = vmul.f32 %v834, %v848
        %v851 = vmul.f32 %v835, %v848
        %v852 = vmul.f32 %v836, %v848
        %v853 = vadd.f32 %v817, %v849
        %v854 = vadd.f32 %v818, %v850
        %v855 = vadd.f32 %v819, %v851
        %v856 = vadd.f32 %v820, %v852
        %s857 = sld [smem:[#allocation8 + $0xe]]
        %v858 = vstv %s857
        %v859 = vmul.f32 %v339, %v858
        %v860 = vmul.f32 %v340, %v858
        %v861 = vmul.f32 %v341, %v858
        %v862 = vmul.f32 %v342, %v858
        %s863 = sld [smem:[#allocation9 + $0xe]]
        %v864 = vstv %s863
        %v865 = vadd.f32 %v859, %v864
        %v866 = vadd.f32 %v860, %v864
        %v867 = vadd.f32 %v861, %v864
        %v868 = vadd.f32 %v862, %v864
        %v869 = vmax.f32 %v865, 0.0
        %v870 = vmax.f32 %v866, 0.0
        %v871 = vmax.f32 %v867, 0.0
        %v872 = vmax.f32 %v868, 0.0
        %s873 = sld [smem:[#allocation11 + $0x1c]]
        %v874 = vstv %s873
        %v875 = vmul.f32 %v869, %v874
        %v876 = vmul.f32 %v870, %v874
        %v877 = vmul.f32 %v871, %v874
        %v878 = vmul.f32 %v872, %v874
        %v879 = vadd.f32 %v843, %v875
        %v880 = vadd.f32 %v844, %v876
        %v881 = vadd.f32 %v845, %v877
        %v882 = vadd.f32 %v846, %v878
        %s883 = sld [smem:[#allocation11 + $0x1d]]
        %v884 = vstv %s883
        %v885 = vmul.f32 %v869, %v884
        %v886 = vmul.f32 %v870, %v884
        %v887 = vmul.f32 %v871, %v884
        %v888 = vmul.f32 %v872, %v884
        %v889 = vadd.f32 %v853, %v885
        %v890 = vadd.f32 %v854, %v886
        %v891 = vadd.f32 %v855, %v887
        %v892 = vadd.f32 %v856, %v888
        %s893 = sld [smem:[#allocation8 + $0xf]]
        %v894 = vstv %s893
        %v895 = vmul.f32 %v339, %v894
        %v896 = vmul.f32 %v340, %v894
        %v897 = vmul.f32 %v341, %v894
        %v898 = vmul.f32 %v342, %v894
        %s899 = sld [smem:[#allocation9 + $0xf]]
        %v900 = vstv %s899
        %v901 = vadd.f32 %v895, %v900
        %v902 = vadd.f32 %v896, %v900
        %v903 = vadd.f32 %v897, %v900
        %v904 = vadd.f32 %v898, %v900
        %v905 = vmax.f32 %v901, 0.0
        %v906 = vmax.f32 %v902, 0.0
        %v907 = vmax.f32 %v903, 0.0
        %v908 = vmax.f32 %v904, 0.0
        %s909 = sld [smem:[#allocation11 + $0x1e]]
        %v910 = vstv %s909
        %v911 = vmul.f32 %v905, %v910
        %v912 = vmul.f32 %v906, %v910
        %v913 = vmul.f32 %v907, %v910
        %v914 = vmul.f32 %v908, %v910
        %v915 = vadd.f32 %v879, %v911
        %v916 = vadd.f32 %v880, %v912
        %v917 = vadd.f32 %v881, %v913
        %v918 = vadd.f32 %v882, %v914
        %s919 = sld [smem:[#allocation11 + $0x1f]]
        %v920 = vstv %s919
        %v921 = vmul.f32 %v905, %v920
        %v922 = vmul.f32 %v906, %v920
        %v923 = vmul.f32 %v907, %v920
        %v924 = vmul.f32 %v908, %v920
        %v925 = vadd.f32 %v889, %v921
        %v926 = vadd.f32 %v890, %v922
        %v927 = vadd.f32 %v891, %v923
        %v928 = vadd.f32 %v892, %v924
        %s929 = sld [smem:[#allocation8 + $0x10]]
        %v930 = vstv %s929
        %v931 = vmul.f32 %v339, %v930
        %v932 = vmul.f32 %v340, %v930
        %v933 = vmul.f32 %v341, %v930
        %v934 = vmul.f32 %v342, %v930
        %s935 = sld [smem:[#allocation9 + $0x10]]
        %v936 = vstv %s935
        %v937 = vadd.f32 %v931, %v936
        %v938 = vadd.f32 %v932, %v936
        %v939 = vadd.f32 %v933, %v936
        %v940 = vadd.f32 %v934, %v936
        %v941 = vmax.f32 %v937, 0.0
        %v942 = vmax.f32 %v938, 0.0
        %v943 = vmax.f32 %v939, 0.0
        %v944 = vmax.f32 %v940, 0.0
        %s945 = sld [smem:[#allocation11 + $0x20]]
        %v946 = vstv %s945
        %v947 = vmul.f32 %v941, %v946
        %v948 = vmul.f32 %v942, %v946
        %v949 = vmul.f32 %v943, %v946
        %v950 = vmul.f32 %v944, %v946
        %v951 = vadd.f32 %v915, %v947
        %v952 = vadd.f32 %v916, %v948
        %v953 = vadd.f32 %v917, %v949
        %v954 = vadd.f32 %v918, %v950
        %s955 = sld [smem:[#allocation11 + $0x21]]
        %v956 = vstv %s955
        %v957 = vmul.f32 %v941, %v956
        %v958 = vmul.f32 %v942, %v956
        %v959 = vmul.f32 %v943, %v956
        %v960 = vmul.f32 %v944, %v956
        %v961 = vadd.f32 %v925, %v957
        %v962 = vadd.f32 %v926, %v958
        %v963 = vadd.f32 %v927, %v959
        %v964 = vadd.f32 %v928, %v960
        %s965 = sld [smem:[#allocation8 + $0x11]]
        %v966 = vstv %s965
        %v967 = vmul.f32 %v339, %v966
        %v968 = vmul.f32 %v340, %v966
        %v969 = vmul.f32 %v341, %v966
        %v970 = vmul.f32 %v342, %v966
        %s971 = sld [smem:[#allocation9 + $0x11]]
        %v972 = vstv %s971
        %v973 = vadd.f32 %v967, %v972
        %v974 = vadd.f32 %v968, %v972
        %v975 = vadd.f32 %v969, %v972
        %v976 = vadd.f32 %v970, %v972
        %v977 = vmax.f32 %v973, 0.0
        %v978 = vmax.f32 %v974, 0.0
        %v979 = vmax.f32 %v975, 0.0
        %v980 = vmax.f32 %v976, 0.0
        %s981 = sld [smem:[#allocation11 + $0x22]]
        %v982 = vstv %s981
        %v983 = vmul.f32 %v977, %v982
        %v984 = vmul.f32 %v978, %v982
        %v985 = vmul.f32 %v979, %v982
        %v986 = vmul.f32 %v980, %v982
        %v987 = vadd.f32 %v951, %v983
        %v988 = vadd.f32 %v952, %v984
        %v989 = vadd.f32 %v953, %v985
        %v990 = vadd.f32 %v954, %v986
        %s991 = sld [smem:[#allocation11 + $0x23]]
        %v992 = vstv %s991
        %v993 = vmul.f32 %v977, %v992
        %v994 = vmul.f32 %v978, %v992
        %v995 = vmul.f32 %v979, %v992
        %v996 = vmul.f32 %v980, %v992
        %v997 = vadd.f32 %v961, %v993
        %v998 = vadd.f32 %v962, %v994
        %v999 = vadd.f32 %v963, %v995
        %v1000 = vadd.f32 %v964, %v996
        %s1001 = sld [smem:[#allocation8 + $0x12]]
        %v1002 = vstv %s1001
        %v1003 = vmul.f32 %v339, %v1002
        %v1004 = vmul.f32 %v340, %v1002
        %v1005 = vmul.f32 %v341, %v1002
        %v1006 = vmul.f32 %v342, %v1002
        %s1007 = sld [smem:[#allocation9 + $0x12]]
        %v1008 = vstv %s1007
        %v1009 = vadd.f32 %v1003, %v1008
        %v1010 = vadd.f32 %v1004, %v1008
        %v1011 = vadd.f32 %v1005, %v1008
        %v1012 = vadd.f32 %v1006, %v1008
        %v1013 = vmax.f32 %v1009, 0.0
        %v1014 = vmax.f32 %v1010, 0.0
        %v1015 = vmax.f32 %v1011, 0.0
        %v1016 = vmax.f32 %v1012, 0.0
        %s1017 = sld [smem:[#allocation11 + $0x24]]
        %v1018 = vstv %s1017
        %v1019 = vmul.f32 %v1013, %v1018
        %v1020 = vmul.f32 %v1014, %v1018
        %v1021 = vmul.f32 %v1015, %v1018
        %v1022 = vmul.f32 %v1016, %v1018
        %v1023 = vadd.f32 %v987, %v1019
        %v1024 = vadd.f32 %v988, %v1020
        %v1025 = vadd.f32 %v989, %v1021
        %v1026 = vadd.f32 %v990, %v1022
        %s1027 = sld [smem:[#allocation11 + $0x25]]
        %v1028 = vstv %s1027
        %v1029 = vmul.f32 %v1013, %v1028
        %v1030 = vmul.f32 %v1014, %v1028
        %v1031 = vmul.f32 %v1015, %v1028
        %v1032 = vmul.f32 %v1016, %v1028
        %v1033 = vadd.f32 %v997, %v1029
        %v1034 = vadd.f32 %v998, %v1030
        %v1035 = vadd.f32 %v999, %v1031
        %v1036 = vadd.f32 %v1000, %v1032
        %s1037 = sld [smem:[#allocation8 + $0x13]]
        %v1038 = vstv %s1037
        %v1039 = vmul.f32 %v339, %v1038
        %v1040 = vmul.f32 %v340, %v1038
        %v1041 = vmul.f32 %v341, %v1038
        %v1042 = vmul.f32 %v342, %v1038
        %s1043 = sld [smem:[#allocation9 + $0x13]]
        %v1044 = vstv %s1043
        %v1045 = vadd.f32 %v1039, %v1044
        %v1046 = vadd.f32 %v1040, %v1044
        %v1047 = vadd.f32 %v1041, %v1044
        %v1048 = vadd.f32 %v1042, %v1044
        %v1049 = vmax.f32 %v1045, 0.0
        %v1050 = vmax.f32 %v1046, 0.0
        %v1051 = vmax.f32 %v1047, 0.0
        %v1052 = vmax.f32 %v1048, 0.0
        %s1053 = sld [smem:[#allocation11 + $0x26]]
        %v1054 = vstv %s1053
        %v1055 = vmul.f32 %v1049, %v1054
        %v1056 = vmul.f32 %v1050, %v1054
        %v1057 = vmul.f32 %v1051, %v1054
        %v1058 = vmul.f32 %v1052, %v1054
        %v1059 = vadd.f32 %v1023, %v1055
        %v1060 = vadd.f32 %v1024, %v1056
        %v1061 = vadd.f32 %v1025, %v1057
        %v1062 = vadd.f32 %v1026, %v1058
        %s1063 = sld [smem:[#allocation11 + $0x27]]
        %v1064 = vstv %s1063
        %v1065 = vmul.f32 %v1049, %v1064
        %v1066 = vmul.f32 %v1050, %v1064
        %v1067 = vmul.f32 %v1051, %v1064
        %v1068 = vmul.f32 %v1052, %v1064
        %v1069 = vadd.f32 %v1033, %v1065
        %v1070 = vadd.f32 %v1034, %v1066
        %v1071 = vadd.f32 %v1035, %v1067
        %v1072 = vadd.f32 %v1036, %v1068
        %s1073 = sld [smem:[#allocation8 + $0x14]]
        %v1074 = vstv %s1073
        %v1075 = vmul.f32 %v339, %v1074
        %v1076 = vmul.f32 %v340, %v1074
        %v1077 = vmul.f32 %v341, %v1074
        %v1078 = vmul.f32 %v342, %v1074
        %s1079 = sld [smem:[#allocation9 + $0x14]]
        %v1080 = vstv %s1079
        %v1081 = vadd.f32 %v1075, %v1080
        %v1082 = vadd.f32 %v1076, %v1080
        %v1083 = vadd.f32 %v1077, %v1080
        %v1084 = vadd.f32 %v1078, %v1080
        %v1085 = vmax.f32 %v1081, 0.0
        %v1086 = vmax.f32 %v1082, 0.0
        %v1087 = vmax.f32 %v1083, 0.0
        %v1088 = vmax.f32 %v1084, 0.0
        %s1089 = sld [smem:[#allocation11 + $0x28]]
        %v1090 = vstv %s1089
        %v1091 = vmul.f32 %v1085, %v1090
        %v1092 = vmul.f32 %v1086, %v1090
        %v1093 = vmul.f32 %v1087, %v1090
        %v1094 = vmul.f32 %v1088, %v1090
        %v1095 = vadd.f32 %v1059, %v1091
        %v1096 = vadd.f32 %v1060, %v1092
        %v1097 = vadd.f32 %v1061, %v1093
        %v1098 = vadd.f32 %v1062, %v1094
        %s1099 = sld [smem:[#allocation11 + $0x29]]
        %v1100 = vstv %s1099
        %v1101 = vmul.f32 %v1085, %v1100
        %v1102 = vmul.f32 %v1086, %v1100
        %v1103 = vmul.f32 %v1087, %v1100
        %v1104 = vmul.f32 %v1088, %v1100
        %v1105 = vadd.f32 %v1069, %v1101
        %v1106 = vadd.f32 %v1070, %v1102
        %v1107 = vadd.f32 %v1071, %v1103
        %v1108 = vadd.f32 %v1072, %v1104
        %s1109 = sld [smem:[#allocation8 + $0x15]]
        %v1110 = vstv %s1109
        %v1111 = vmul.f32 %v339, %v1110
        %v1112 = vmul.f32 %v340, %v1110
        %v1113 = vmul.f32 %v341, %v1110
        %v1114 = vmul.f32 %v342, %v1110
        %s1115 = sld [smem:[#allocation9 + $0x15]]
        %v1116 = vstv %s1115
        %v1117 = vadd.f32 %v1111, %v1116
        %v1118 = vadd.f32 %v1112, %v1116
        %v1119 = vadd.f32 %v1113, %v1116
        %v1120 = vadd.f32 %v1114, %v1116
        %v1121 = vmax.f32 %v1117, 0.0
        %v1122 = vmax.f32 %v1118, 0.0
        %v1123 = vmax.f32 %v1119, 0.0
        %v1124 = vmax.f32 %v1120, 0.0
        %s1125 = sld [smem:[#allocation11 + $0x2a]]
        %v1126 = vstv %s1125
        %v1127 = vmul.f32 %v1121, %v1126
        %v1128 = vmul.f32 %v1122, %v1126
        %v1129 = vmul.f32 %v1123, %v1126
        %v1130 = vmul.f32 %v1124, %v1126
        %v1131 = vadd.f32 %v1095, %v1127
        %v1132 = vadd.f32 %v1096, %v1128
        %v1133 = vadd.f32 %v1097, %v1129
        %v1134 = vadd.f32 %v1098, %v1130
        %s1135 = sld [smem:[#allocation11 + $0x2b]]
        %v1136 = vstv %s1135
        %v1137 = vmul.f32 %v1121, %v1136
        %v1138 = vmul.f32 %v1122, %v1136
        %v1139 = vmul.f32 %v1123, %v1136
        %v1140 = vmul.f32 %v1124, %v1136
        %v1141 = vadd.f32 %v1105, %v1137
        %v1142 = vadd.f32 %v1106, %v1138
        %v1143 = vadd.f32 %v1107, %v1139
        %v1144 = vadd.f32 %v1108, %v1140
        %s1145 = sld [smem:[#allocation8 + $0x16]]
        %v1146 = vstv %s1145
        %v1147 = vmul.f32 %v339, %v1146
        %v1148 = vmul.f32 %v340, %v1146
        %v1149 = vmul.f32 %v341, %v1146
        %v1150 = vmul.f32 %v342, %v1146
        %s1151 = sld [smem:[#allocation9 + $0x16]]
        %v1152 = vstv %s1151
        %v1153 = vadd.f32 %v1147, %v1152
        %v1154 = vadd.f32 %v1148, %v1152
        %v1155 = vadd.f32 %v1149, %v1152
        %v1156 = vadd.f32 %v1150, %v1152
        %v1157 = vmax.f32 %v1153, 0.0
        %v1158 = vmax.f32 %v1154, 0.0
        %v1159 = vmax.f32 %v1155, 0.0
        %v1160 = vmax.f32 %v1156, 0.0
        %s1161 = sld [smem:[#allocation11 + $0x2c]]
        %v1162 = vstv %s1161
        %v1163 = vmul.f32 %v1157, %v1162
        %v1164 = vmul.f32 %v1158, %v1162
        %v1165 = vmul.f32 %v1159, %v1162
        %v1166 = vmul.f32 %v1160, %v1162
        %v1167 = vadd.f32 %v1131, %v1163
        %v1168 = vadd.f32 %v1132, %v1164
        %v1169 = vadd.f32 %v1133, %v1165
        %v1170 = vadd.f32 %v1134, %v1166
        %s1171 = sld [smem:[#allocation11 + $0x2d]]
        %v1172 = vstv %s1171
        %v1173 = vmul.f32 %v1157, %v1172
        %v1174 = vmul.f32 %v1158, %v1172
        %v1175 = vmul.f32 %v1159, %v1172
        %v1176 = vmul.f32 %v1160, %v1172
        %v1177 = vadd.f32 %v1141, %v1173
        %v1178 = vadd.f32 %v1142, %v1174
        %v1179 = vadd.f32 %v1143, %v1175
        %v1180 = vadd.f32 %v1144, %v1176
        %s1181 = sld [smem:[#allocation8 + $0x17]]
        %v1182 = vstv %s1181
        %v1183 = vmul.f32 %v339, %v1182
        %v1184 = vmul.f32 %v340, %v1182
        %v1185 = vmul.f32 %v341, %v1182
        %v1186 = vmul.f32 %v342, %v1182
        %s1187 = sld [smem:[#allocation9 + $0x17]]
        %v1188 = vstv %s1187
        %v1189 = vadd.f32 %v1183, %v1188
        %v1190 = vadd.f32 %v1184, %v1188
        %v1191 = vadd.f32 %v1185, %v1188
        %v1192 = vadd.f32 %v1186, %v1188
        %v1193 = vmax.f32 %v1189, 0.0
        %v1194 = vmax.f32 %v1190, 0.0
        %v1195 = vmax.f32 %v1191, 0.0
        %v1196 = vmax.f32 %v1192, 0.0
        %s1197 = sld [smem:[#allocation11 + $0x2e]]
        %v1198 = vstv %s1197
        %v1199 = vmul.f32 %v1193, %v1198
        %v1200 = vmul.f32 %v1194, %v1198
        %v1201 = vmul.f32 %v1195, %v1198
        %v1202 = vmul.f32 %v1196, %v1198
        %v1203 = vadd.f32 %v1167, %v1199
        %v1204 = vadd.f32 %v1168, %v1200
        %v1205 = vadd.f32 %v1169, %v1201
        %v1206 = vadd.f32 %v1170, %v1202
        %s1207 = sld [smem:[#allocation11 + $0x2f]]
        %v1208 = vstv %s1207
        %v1209 = vmul.f32 %v1193, %v1208
        %v1210 = vmul.f32 %v1194, %v1208
        %v1211 = vmul.f32 %v1195, %v1208
        %v1212 = vmul.f32 %v1196, %v1208
        %v1213 = vadd.f32 %v1177, %v1209
        %v1214 = vadd.f32 %v1178, %v1210
        %v1215 = vadd.f32 %v1179, %v1211
        %v1216 = vadd.f32 %v1180, %v1212
        %s1217 = sld [smem:[#allocation8 + $0x18]]
        %v1218 = vstv %s1217
        %v1219 = vmul.f32 %v339, %v1218
        %v1220 = vmul.f32 %v340, %v1218
        %v1221 = vmul.f32 %v341, %v1218
        %v1222 = vmul.f32 %v342, %v1218
        %s1223 = sld [smem:[#allocation9 + $0x18]]
        %v1224 = vstv %s1223
        %v1225 = vadd.f32 %v1219, %v1224
        %v1226 = vadd.f32 %v1220, %v1224
        %v1227 = vadd.f32 %v1221, %v1224
        %v1228 = vadd.f32 %v1222, %v1224
        %v1229 = vmax.f32 %v1225, 0.0
        %v1230 = vmax.f32 %v1226, 0.0
        %v1231 = vmax.f32 %v1227, 0.0
        %v1232 = vmax.f32 %v1228, 0.0
        %s1233 = sld [smem:[#allocation11 + $0x30]]
        %v1234 = vstv %s1233
        %v1235 = vmul.f32 %v1229, %v1234
        %v1236 = vmul.f32 %v1230, %v1234
        %v1237 = vmul.f32 %v1231, %v1234
        %v1238 = vmul.f32 %v1232, %v1234
        %v1239 = vadd.f32 %v1203, %v1235
        %v1240 = vadd.f32 %v1204, %v1236
        %v1241 = vadd.f32 %v1205, %v1237
        %v1242 = vadd.f32 %v1206, %v1238
        %s1243 = sld [smem:[#allocation11 + $0x31]]
        %v1244 = vstv %s1243
        %v1245 = vmul.f32 %v1229, %v1244
        %v1246 = vmul.f32 %v1230, %v1244
        %v1247 = vmul.f32 %v1231, %v1244
        %v1248 = vmul.f32 %v1232, %v1244
        %v1249 = vadd.f32 %v1213, %v1245
        %v1250 = vadd.f32 %v1214, %v1246
        %v1251 = vadd.f32 %v1215, %v1247
        %v1252 = vadd.f32 %v1216, %v1248
        %s1253 = sld [smem:[#allocation8 + $0x19]]
        %v1254 = vstv %s1253
        %v1255 = vmul.f32 %v339, %v1254
        %v1256 = vmul.f32 %v340, %v1254
        %v1257 = vmul.f32 %v341, %v1254
        %v1258 = vmul.f32 %v342, %v1254
        %s1259 = sld [smem:[#allocation9 + $0x19]]
        %v1260 = vstv %s1259
        %v1261 = vadd.f32 %v1255, %v1260
        %v1262 = vadd.f32 %v1256, %v1260
        %v1263 = vadd.f32 %v1257, %v1260
        %v1264 = vadd.f32 %v1258, %v1260
        %v1265 = vmax.f32 %v1261, 0.0
        %v1266 = vmax.f32 %v1262, 0.0
        %v1267 = vmax.f32 %v1263, 0.0
        %v1268 = vmax.f32 %v1264, 0.0
        %s1269 = sld [smem:[#allocation11 + $0x32]]
        %v1270 = vstv %s1269
        %v1271 = vmul.f32 %v1265, %v1270
        %v1272 = vmul.f32 %v1266, %v1270
        %v1273 = vmul.f32 %v1267, %v1270
        %v1274 = vmul.f32 %v1268, %v1270
        %v1275 = vadd.f32 %v1239, %v1271
        %v1276 = vadd.f32 %v1240, %v1272
        %v1277 = vadd.f32 %v1241, %v1273
        %v1278 = vadd.f32 %v1242, %v1274
        %s1279 = sld [smem:[#allocation11 + $0x33]]
        %v1280 = vstv %s1279
        %v1281 = vmul.f32 %v1265, %v1280
        %v1282 = vmul.f32 %v1266, %v1280
        %v1283 = vmul.f32 %v1267, %v1280
        %v1284 = vmul.f32 %v1268, %v1280
        %v1285 = vadd.f32 %v1249, %v1281
        %v1286 = vadd.f32 %v1250, %v1282
        %v1287 = vadd.f32 %v1251, %v1283
        %v1288 = vadd.f32 %v1252, %v1284
        %s1289 = sld [smem:[#allocation8 + $0x1a]]
        %v1290 = vstv %s1289
        %v1291 = vmul.f32 %v339, %v1290
        %v1292 = vmul.f32 %v340, %v1290
        %v1293 = vmul.f32 %v341, %v1290
        %v1294 = vmul.f32 %v342, %v1290
        %s1295 = sld [smem:[#allocation9 + $0x1a]]
        %v1296 = vstv %s1295
        %v1297 = vadd.f32 %v1291, %v1296
        %v1298 = vadd.f32 %v1292, %v1296
        %v1299 = vadd.f32 %v1293, %v1296
        %v1300 = vadd.f32 %v1294, %v1296
        %v1301 = vmax.f32 %v1297, 0.0
        %v1302 = vmax.f32 %v1298, 0.0
        %v1303 = vmax.f32 %v1299, 0.0
        %v1304 = vmax.f32 %v1300, 0.0
        %s1305 = sld [smem:[#allocation11 + $0x34]]
        %v1306 = vstv %s1305
        %v1307 = vmul.f32 %v1301, %v1306
        %v1308 = vmul.f32 %v1302, %v1306
        %v1309 = vmul.f32 %v1303, %v1306
        %v1310 = vmul.f32 %v1304, %v1306
        %v1311 = vadd.f32 %v1275, %v1307
        %v1312 = vadd.f32 %v1276, %v1308
        %v1313 = vadd.f32 %v1277, %v1309
        %v1314 = vadd.f32 %v1278, %v1310
        %s1315 = sld [smem:[#allocation11 + $0x35]]
        %v1316 = vstv %s1315
        %v1317 = vmul.f32 %v1301, %v1316
        %v1318 = vmul.f32 %v1302, %v1316
        %v1319 = vmul.f32 %v1303, %v1316
        %v1320 = vmul.f32 %v1304, %v1316
        %v1321 = vadd.f32 %v1285, %v1317
        %v1322 = vadd.f32 %v1286, %v1318
        %v1323 = vadd.f32 %v1287, %v1319
        %v1324 = vadd.f32 %v1288, %v1320
        %s1325 = sld [smem:[#allocation8 + $0x1b]]
        %v1326 = vstv %s1325
        %v1327 = vmul.f32 %v339, %v1326
        %v1328 = vmul.f32 %v340, %v1326
        %v1329 = vmul.f32 %v341, %v1326
        %v1330 = vmul.f32 %v342, %v1326
        %s1331 = sld [smem:[#allocation9 + $0x1b]]
        %v1332 = vstv %s1331
        %v1333 = vadd.f32 %v1327, %v1332
        %v1334 = vadd.f32 %v1328, %v1332
        %v1335 = vadd.f32 %v1329, %v1332
        %v1336 = vadd.f32 %v1330, %v1332
        %v1337 = vmax.f32 %v1333, 0.0
        %v1338 = vmax.f32 %v1334, 0.0
        %v1339 = vmax.f32 %v1335, 0.0
        %v1340 = vmax.f32 %v1336, 0.0
        %s1341 = sld [smem:[#allocation11 + $0x36]]
        %v1342 = vstv %s1341
        %v1343 = vmul.f32 %v1337, %v1342
        %v1344 = vmul.f32 %v1338, %v1342
        %v1345 = vmul.f32 %v1339, %v1342
        %v1346 = vmul.f32 %v1340, %v1342
        %v1347 = vadd.f32 %v1311, %v1343
        %v1348 = vadd.f32 %v1312, %v1344
        %v1349 = vadd.f32 %v1313, %v1345
        %v1350 = vadd.f32 %v1314, %v1346
        %s1351 = sld [smem:[#allocation11 + $0x37]]
        %v1352 = vstv %s1351
        %v1353 = vmul.f32 %v1337, %v1352
        %v1354 = vmul.f32 %v1338, %v1352
        %v1355 = vmul.f32 %v1339, %v1352
        %v1356 = vmul.f32 %v1340, %v1352
        %v1357 = vadd.f32 %v1321, %v1353
        %v1358 = vadd.f32 %v1322, %v1354
        %v1359 = vadd.f32 %v1323, %v1355
        %v1360 = vadd.f32 %v1324, %v1356
        %s1361 = sld [smem:[#allocation8 + $0x1c]]
        %v1362 = vstv %s1361
        %v1363 = vmul.f32 %v339, %v1362
        %v1364 = vmul.f32 %v340, %v1362
        %v1365 = vmul.f32 %v341, %v1362
        %v1366 = vmul.f32 %v342, %v1362
        %s1367 = sld [smem:[#allocation9 + $0x1c]]
        %v1368 = vstv %s1367
        %v1369 = vadd.f32 %v1363, %v1368
        %v1370 = vadd.f32 %v1364, %v1368
        %v1371 = vadd.f32 %v1365, %v1368
        %v1372 = vadd.f32 %v1366, %v1368
        %v1373 = vmax.f32 %v1369, 0.0
        %v1374 = vmax.f32 %v1370, 0.0
        %v1375 = vmax.f32 %v1371, 0.0
        %v1376 = vmax.f32 %v1372, 0.0
        %s1377 = sld [smem:[#allocation11 + $0x38]]
        %v1378 = vstv %s1377
        %v1379 = vmul.f32 %v1373, %v1378
        %v1380 = vmul.f32 %v1374, %v1378
        %v1381 = vmul.f32 %v1375, %v1378
        %v1382 = vmul.f32 %v1376, %v1378
        %v1383 = vadd.f32 %v1347, %v1379
        %v1384 = vadd.f32 %v1348, %v1380
        %v1385 = vadd.f32 %v1349, %v1381
        %v1386 = vadd.f32 %v1350, %v1382
        %s1387 = sld [smem:[#allocation11 + $0x39]]
        %v1388 = vstv %s1387
        %v1389 = vmul.f32 %v1373, %v1388
        %v1390 = vmul.f32 %v1374, %v1388
        %v1391 = vmul.f32 %v1375, %v1388
        %v1392 = vmul.f32 %v1376, %v1388
        %v1393 = vadd.f32 %v1357, %v1389
        %v1394 = vadd.f32 %v1358, %v1390
        %v1395 = vadd.f32 %v1359, %v1391
        %v1396 = vadd.f32 %v1360, %v1392
        %s1397 = sld [smem:[#allocation8 + $0x1d]]
        %v1398 = vstv %s1397
        %v1399 = vmul.f32 %v339, %v1398
        %v1400 = vmul.f32 %v340, %v1398
        %v1401 = vmul.f32 %v341, %v1398
        %v1402 = vmul.f32 %v342, %v1398
        %s1403 = sld [smem:[#allocation9 + $0x1d]]
        %v1404 = vstv %s1403
        %v1405 = vadd.f32 %v1399, %v1404
        %v1406 = vadd.f32 %v1400, %v1404
        %v1407 = vadd.f32 %v1401, %v1404
        %v1408 = vadd.f32 %v1402, %v1404
        %v1409 = vmax.f32 %v1405, 0.0
        %v1410 = vmax.f32 %v1406, 0.0
        %v1411 = vmax.f32 %v1407, 0.0
        %v1412 = vmax.f32 %v1408, 0.0
        %s1413 = sld [smem:[#allocation11 + $0x3a]]
        %v1414 = vstv %s1413
        %v1415 = vmul.f32 %v1409, %v1414
        %v1416 = vmul.f32 %v1410, %v1414
        %v1417 = vmul.f32 %v1411, %v1414
        %v1418 = vmul.f32 %v1412, %v1414
        %v1419 = vadd.f32 %v1383, %v1415
        %v1420 = vadd.f32 %v1384, %v1416
        %v1421 = vadd.f32 %v1385, %v1417
        %v1422 = vadd.f32 %v1386, %v1418
        %s1423 = sld [smem:[#allocation11 + $0x3b]]
        %v1424 = vstv %s1423
        %v1425 = vmul.f32 %v1409, %v1424
        %v1426 = vmul.f32 %v1410, %v1424
        %v1427 = vmul.f32 %v1411, %v1424
        %v1428 = vmul.f32 %v1412, %v1424
        %v1429 = vadd.f32 %v1393, %v1425
        %v1430 = vadd.f32 %v1394, %v1426
        %v1431 = vadd.f32 %v1395, %v1427
        %v1432 = vadd.f32 %v1396, %v1428
        %s1433 = sld [smem:[#allocation8 + $0x1e]]
        %v1434 = vstv %s1433
        %v1435 = vmul.f32 %v339, %v1434
        %v1436 = vmul.f32 %v340, %v1434
        %v1437 = vmul.f32 %v341, %v1434
        %v1438 = vmul.f32 %v342, %v1434
        %s1439 = sld [smem:[#allocation9 + $0x1e]]
        %v1440 = vstv %s1439
        %v1441 = vadd.f32 %v1435, %v1440
        %v1442 = vadd.f32 %v1436, %v1440
        %v1443 = vadd.f32 %v1437, %v1440
        %v1444 = vadd.f32 %v1438, %v1440
        %v1445 = vmax.f32 %v1441, 0.0
        %v1446 = vmax.f32 %v1442, 0.0
        %v1447 = vmax.f32 %v1443, 0.0
        %v1448 = vmax.f32 %v1444, 0.0
        %s1449 = sld [smem:[#allocation11 + $0x3c]]
        %v1450 = vstv %s1449
        %v1451 = vmul.f32 %v1445, %v1450
        %v1452 = vmul.f32 %v1446, %v1450
        %v1453 = vmul.f32 %v1447, %v1450
        %v1454 = vmul.f32 %v1448, %v1450
        %v1455 = vadd.f32 %v1419, %v1451
        %v1456 = vadd.f32 %v1420, %v1452
        %v1457 = vadd.f32 %v1421, %v1453
        %v1458 = vadd.f32 %v1422, %v1454
        %s1459 = sld [smem:[#allocation11 + $0x3d]]
        %v1460 = vstv %s1459
        %v1461 = vmul.f32 %v1445, %v1460
        %v1462 = vmul.f32 %v1446, %v1460
        %v1463 = vmul.f32 %v1447, %v1460
        %v1464 = vmul.f32 %v1448, %v1460
        %v1465 = vadd.f32 %v1429, %v1461
        %v1466 = vadd.f32 %v1430, %v1462
        %v1467 = vadd.f32 %v1431, %v1463
        %v1468 = vadd.f32 %v1432, %v1464
        %s1469 = sld [smem:[#allocation8 + $0x1f]]
        %v1470 = vstv %s1469
        %v1471 = vmul.f32 %v339, %v1470
        %v1472 = vmul.f32 %v340, %v1470
        %v1473 = vmul.f32 %v341, %v1470
        %v1474 = vmul.f32 %v342, %v1470
        %s1475 = sld [smem:[#allocation9 + $0x1f]]
        %v1476 = vstv %s1475
        %v1477 = vadd.f32 %v1471, %v1476
        %v1478 = vadd.f32 %v1472, %v1476
        %v1479 = vadd.f32 %v1473, %v1476
        %v1480 = vadd.f32 %v1474, %v1476
        %v1481 = vmax.f32 %v1477, 0.0
        %v1482 = vmax.f32 %v1478, 0.0
        %v1483 = vmax.f32 %v1479, 0.0
        %v1484 = vmax.f32 %v1480, 0.0
        %s1485 = sld [smem:[#allocation11 + $0x3e]]
        %v1486 = vstv %s1485
        %v1487 = vmul.f32 %v1481, %v1486
        %v1488 = vmul.f32 %v1482, %v1486
        %v1489 = vmul.f32 %v1483, %v1486
        %v1490 = vmul.f32 %v1484, %v1486
        %v1491 = vadd.f32 %v1455, %v1487
        %v1492 = vadd.f32 %v1456, %v1488
        %v1493 = vadd.f32 %v1457, %v1489
        %v1494 = vadd.f32 %v1458, %v1490
        %s1495 = sld [smem:[#allocation11 + $0x3f]]
        %v1496 = vstv %s1495
        %v1497 = vmul.f32 %v1481, %v1496
        %v1498 = vmul.f32 %v1482, %v1496
        %v1499 = vmul.f32 %v1483, %v1496
        %v1500 = vmul.f32 %v1484, %v1496
        %v1501 = vadd.f32 %v1465, %v1497
        %v1502 = vadd.f32 %v1466, %v1498
        %v1503 = vadd.f32 %v1467, %v1499
        %v1504 = vadd.f32 %v1468, %v1500
        %v1505 = vmul.f32 %v1491, %v343
        %v1506 = vmul.f32 %v1492, %v344
        %v1507 = vmul.f32 %v1493, %v345
        %v1508 = vmul.f32 %v1494, %v346
        %1509 = vst [vmem:[%s336] sm:$0xff] %v1505
        %1510 = vst [vmem:[%s336 + $0x8] sm:$0xff] %v1506
        %1511 = vst [vmem:[%s336 + $0x10] sm:$0xff] %v1507
        %1512 = vst [vmem:[%s336 + $0x18] sm:$0xff] %v1508
        %v1513 = vmul.f32 %v1501, %v343
        %v1514 = vmul.f32 %v1502, %v344
        %v1515 = vmul.f32 %v1503, %v345
        %v1516 = vmul.f32 %v1504, %v346
        %s1517 = scalar_lea.vmem %s336, 32 [#allocation14]
        %1518 = vst [vmem:[%s1517] sm:$0xff] %v1513
        %1519 = vst [vmem:[%s1517 + $0x8] sm:$0xff] %v1514
        %1520 = vst [vmem:[%s1517 + $0x10] sm:$0xff] %v1515
        %1521 = vst [vmem:[%s1517 + $0x18] sm:$0xff] %v1516
        %s1522 = sand.u32 %s166, 1
        %s1523 = scalar_lea.sflag [#allocation4], %s1522
        %s1524 = sand.u32 %s166, 1
        %s1525 = smul.addr %s1524, 64
        %s1526 = scalar_lea.vmem [#allocation14], %s1525
        // Predicated region
        $region69: #{tpu_custom_call.1} parent=43 // pred_check
          %p1527 = pneg %p176
        $region70: #{tpu_custom_call.1} parent=43 // pred_check_branch
          %1529 = sbr.rel (%p1527) target = $region72
        $region71: #{tpu_custom_call.1} parent=43 // pred_region
          #allocation16 [shape = 'u32[6]{0}', space=smem, size = 0x18, scoped, tag = 'DMA stride descriptor']
          %s1530 = smul.u32 4, %s27
          %s1532 = ssub.s32 1024, 1024
          %1533 = vsyncadd %s1523, %s1532
          %s1534 = smul.addr %s1530, 128
          %s1535 = scalar_lea.hbm %s6, %s1534
          %s1537 = sshll.u32 1, 14
          %s1538 = sxor.u32 4294967295, %s1537
          %s1541 = sshll.u32 7, 18
          %s1542 = sxor.u32 4294967295, %s1541
          %s1543 = sand.u32 0, %s1542
          %s1545 = sor.u32 %s1543, 0
          %s1546 = sshll.u32 %s1526, 4
          %s1547 = int_to_ptr.vmem [resolvable:$true] %s1546
          %1553 = sst [smem:[#allocation16]] 512
          %s1554 = scalar_lea.smem [#allocation16], 1
          %1555 = sst [smem:[%s1554]] 1024
          %s1556 = scalar_lea.smem [#allocation16], 2
          %1557 = sst [smem:[%s1556]] 4
          %s1558 = scalar_lea.smem [#allocation16], 3
          %1559 = sst [smem:[%s1558]] 128
          %s1560 = scalar_lea.smem [#allocation16], 4
          %1561 = sst [smem:[%s1560]] 128
          %s1562 = scalar_lea.smem [#allocation16], 5
          %1563 = sst [smem:[%s1562]] 8
          %1565 = dma.general %s1547, 1024, %s1535, %s1523, 131072, [#allocation16], %s1545, 0
        $region72: #{tpu_custom_call.1} parent=43 // pred_fallthru
          _
      $region44: #{tpu_custom_call.1} parent=5 // pred_fallthru
        _
      %p1566 = scmp.le.s32.totalorder 2, %s22
      // Predicated region
      $region73: #{tpu_custom_call.1} parent=5 // pred_check
        %p1567 = pneg %p1566
      $region74: #{tpu_custom_call.1} parent=5 // pred_check_branch
        %1569 = sbr.rel (%p1567) target = $region76
      $region75: #{tpu_custom_call.1} parent=5 // pred_region
        %s1570 = ssub.s32 %s22, 2
        // Predicated region
        $region77: #{tpu_custom_call.1} parent=75 // pred_check
          %p1571 = pneg %p182
        $region78: #{tpu_custom_call.1} parent=75 // pred_check_branch
          %1573 = sbr.rel (%p1571) target = $region80
        $region79: #{tpu_custom_call.1} parent=75 // pred_region
          %s1574 = sand.u32 %s167, 1
          %s1575 = scalar_lea.sflag [#allocation4], %s1574
          %s1576 = sand.u32 %s167, 1
          %s1577 = smul.addr %s1576, 64
          %s1578 = scalar_lea.vmem [#allocation14], %s1577
          %1579 = dma.done %s1575, 1024
        $region80: #{tpu_custom_call.1} parent=75 // pred_fallthru
          _
      $region76: #{tpu_custom_call.1} parent=5 // pred_fallthru
        _
    $region6: #{tpu_custom_call.1} parent=1 // loop_footer
      %s26 = sadd.s32 1, %s22
    $region7: #{tpu_custom_call.1} parent=1 // loop_footer_branch
      %21 = sbr.rel target = $region3
    $region8: #{tpu_custom_call.1} parent=1 // loop_exit
      _
    %1580 = vsyncpa [#allocation3], 1
    %s1581 = scalar_lea.sflag [#allocation3], 1
    %1582 = vsyncpa %s1581, 1
    %1583 = vsyncpa [#allocation7], 1
    %1584 = vsyncpa [#allocation4], 1
    %s1585 = scalar_lea.sflag [#allocation4], 1
    %1586 = vsyncpa %s1585, 1
    %1587 = vsyncpa [#allocation5], 1
    %s1588 = scalar_lea.sflag [#allocation5], 1
    %1589 = vsyncpa %s1588, 1
    %1590 = vsyncpa [#allocation10], 1
    %1591 = vsyncpa [#allocation13], 1

</llo_original>
